<compile_context>
chip_gen: v5e
topology: v5e:2x2
jax: 0.10.0
libtpu: 0.0.40
codegen_flags: <defaults>
</compile_context>

<pallas_src>
import jax
import jax.numpy as jnp
from jax.experimental import pallas as pl
from jax.experimental.pallas import tpu as pltpu

HOPFIELD_ITERS = 10  # matches HopfieldNetwork.retrieve_pattern(n_iterations=10)


def hopfield_dqn_kernel(
    x_ref,             # (B, D_IN)
    ew1_ref, eb1_ref,  # encoder linear 1: (D_IN, H), (1, H)
    ew2_ref, eb2_ref,  # encoder linear 2: (H, E_PAD), (1, E_PAD)   [cols >= E are 0]
    hop_ref,           # hopfield weights: (E, E_PAD)               [cols >= E are 0]
    nw1x_ref,          # network linear 1, x-part:         (D_IN, H)
    nw1r_ref,          # network linear 1, retrieved-part: (E_PAD, H) [rows >= E are 0]
    nb1_ref,           # (1, H)
    nw2_ref, nb2_ref,  # (H, H), (1, H)
    nw3_ref, nb3_ref,  # (H, O), (1, O)
    out_ref,           # (B, O)
    state_scr,         # VMEM (B, E_PAD) f32  — bipolar Hopfield state across sweeps
    changed_ref,       # SMEM (1,) int32      — convergence flag for early exit
):
    x = x_ref[...]

    # ---- encoder: Linear -> ReLU -> Linear ----
    # (default matmul precision; pass precision=jax.lax.Precision.HIGHEST here
    #  if bit-level parity with torch f32 matmuls is ever required)
    h = jnp.maximum(
        jnp.dot(x, ew1_ref[...], preferred_element_type=jnp.float32) + eb1_ref[...],
        0.0,
    )
    encoded = jnp.dot(h, ew2_ref[...], preferred_element_type=jnp.float32) + eb2_ref[...]

    B = x_ref.shape[0]
    E = hop_ref.shape[0]        # real (unpadded) episodic size — static
    E_PAD = hop_ref.shape[1]    # lane-padded episodic size (multiple of 128)

    # ---- Hopfield retrieval (asynchronous updates, exactly as in numpy ref) ----
    # state = where(probe > 0, 1, -1); padded lanes start (and stay) at -1 and
    # never influence real components because their hop_w columns are 0.
    state_scr[...] = jnp.where(encoded > 0.0, 1.0, -1.0)
    changed_ref[0] = jnp.int32(1)

    # hoisted out of all loops (computed once)
    col_idx = jax.lax.broadcasted_iota(jnp.int32, (B, E_PAD), 1)

    @pl.loop(0, HOPFIELD_ITERS)
    def _outer(_step):
        # Early exit: if the previous sweep changed nothing, the state is a
        # fixed point and all remaining sweeps are no-ops (bit-identical).
        @pl.when(changed_ref[0] != 0)
        def _():
            st0 = state_scr[...]          # one load per sweep
            st = st0
            for i in range(E):            # fully unrolled — E is static
                w_i = hop_ref[i:i + 1, :]                       # static row view, (1, E_PAD)
                act = jnp.sum(st * w_i, axis=1, keepdims=True)  # (B, 1)
                newv = jnp.where(act > 0.0, 1.0, -1.0)          # tie at 0 -> -1 (matches ref)
                # asynchronous (sequential) in-register update of component i
                st = jnp.where(col_idx == i, newv, st)
            state_scr[...] = st           # one store per sweep
            diff = jnp.sum(jnp.abs(st - st0))
            changed_ref[0] = (diff > 0.0).astype(jnp.int32)

    retrieved = jnp.where(state_scr[...] > 0.0, 1.0, 0.0)        # (B, E_PAD), padded lanes = 0

    # ---- Q-network: Linear(cat[x, retrieved]) -> ReLU -> Linear -> ReLU -> Linear
    # cat + single matmul is expressed as the sum of two matmuls on the split weight.
    h1 = jnp.maximum(
        jnp.dot(x, nw1x_ref[...], preferred_element_type=jnp.float32)
        + jnp.dot(retrieved, nw1r_ref[...], preferred_element_type=jnp.float32)
        + nb1_ref[...],
        0.0,
    )
    h2 = jnp.maximum(
        jnp.dot(h1, nw2_ref[...], preferred_element_type=jnp.float32) + nb2_ref[...],
        0.0,
    )
    out_ref[...] = (
        jnp.dot(h2, nw3_ref[...], preferred_element_type=jnp.float32) + nb3_ref[...]
    )


def hopfield_dqn_forward(x, params):
    """x: (B, D_IN) f32.  params: dict of pre-transposed / lane-padded weights."""
    B = x.shape[0]
    O = params["nb3"].shape[-1]
    E_PAD = params["hop_w"].shape[1]
    args = (
        x,
        params["ew1"], params["eb1"],
        params["ew2"], params["eb2"],
        params["hop_w"],
        params["nw1x"], params["nw1r"], params["nb1"],
        params["nw2"], params["nb2"],
        params["nw3"], params["nb3"],
    )
    vmem = pl.BlockSpec(memory_space=pltpu.MemorySpace.VMEM)
    return pl.pallas_call(
        hopfield_dqn_kernel,
        out_shape=jax.ShapeDtypeStruct((B, O), jnp.float32),
        in_specs=[vmem] * len(args),
        out_specs=vmem,
        scratch_shapes=[
            pltpu.VMEM((B, E_PAD), jnp.float32),   # Hopfield bipolar state
            pltpu.SMEM((1,), jnp.int32),           # convergence flag
        ],
    )(*args)


def _linear_init(key, fan_in, fan_out):
    """Deterministic PyTorch-style uniform(-1/sqrt(fan_in), 1/sqrt(fan_in)) init.
    Returns weight already transposed to (fan_in, fan_out)."""
    kw, kb = jax.random.split(key)
    bound = 1.0 / (float(fan_in) ** 0.5)
    w = jax.random.uniform(kw, (fan_in, fan_out), jnp.float32, -bound, bound)
    b = jax.random.uniform(kb, (1, fan_out), jnp.float32, -bound, bound)
    return w, b


def make_params(key, d_in, hidden, episodic, out):
    keys = jax.random.split(key, 8)
    ew1, eb1 = _linear_init(keys[0], d_in, hidden)
    ew2, eb2 = _linear_init(keys[1], hidden, episodic)
    nw1, nb1 = _linear_init(keys[2], d_in + episodic, hidden)
    nw2, nb2 = _linear_init(keys[3], hidden, hidden)
    nw3, nb3 = _linear_init(keys[4], hidden, out)

    # Deterministically populate the Hopfield memory exactly as
    # HopfieldNetwork.store_pattern would (3 stored patterns).
    # TODO(synk): store_pattern / store_episode are host-side stateful ops on the
    # HopfieldNetwork object; only the resulting weight matrix enters the kernel.
    raw = jax.random.normal(keys[5], (3, episodic), jnp.float32)
    mems = jnp.where(raw > 0.0, 1.0, -1.0)
    hop_w = jnp.zeros((episodic, episodic), jnp.float32)
    for m in mems:
        hop_w = hop_w + jnp.outer(m, m)
    hop_w = hop_w * (1.0 - jnp.eye(episodic, dtype=jnp.float32))
    hop_w = hop_w / float(mems.shape[0])

    # Lane-pad the episodic axis to a multiple of 128; padded weights/bias are
    # exactly 0, so the async dynamics and the Q-net output are unchanged.
    e_pad = ((episodic + 127) // 128) * 128
    pad = e_pad - episodic
    ew2_p = jnp.pad(ew2, ((0, 0), (0, pad)))
    eb2_p = jnp.pad(eb2, ((0, 0), (0, pad)))
    hop_p = jnp.pad(hop_w, ((0, 0), (0, pad)))          # (episodic, e_pad)
    nw1r_p = jnp.pad(nw1[d_in:, :], ((0, pad), (0, 0)))  # (e_pad, hidden)

    return {
        "ew1": ew1, "eb1": eb1,
        "ew2": ew2_p, "eb2": eb2_p,
        "hop_w": hop_p,
        # split network-linear-1 weight to implement cat([x, retrieved]) @ W
        "nw1x": nw1[:d_in, :], "nw1r": nw1r_p, "nb1": nb1,
        "nw2": nw2, "nb2": nb2,
        "nw3": nw3, "nb3": nb3,
    }


if __name__ == "__main__":
    B, D_IN, HIDDEN, EPISODIC, OUT = 2, 16, 32, 64, 2

    root = jax.random.PRNGKey(0)
    k_params, k_x = jax.random.split(root)
    params = make_params(k_params, D_IN, HIDDEN, EPISODIC, OUT)
    x = jax.random.normal(k_x, (B, D_IN), jnp.float32)

    q = hopfield_dqn_forward(x, params)
    jax.block_until_ready(q)
    assert q.shape == (B, OUT) and q.dtype == jnp.float32
    print("KERNEL_OK")
</pallas_src>

<mosaic_0001>
module attributes {stable_mosaic.version = 11 : i64} {
  func.func @hopfield_dqn_kernel(%arg0: memref<2x16xf32, #tpu.memory_space<vmem>>, %arg1: memref<16x32xf32, #tpu.memory_space<vmem>>, %arg2: memref<1x32xf32, #tpu.memory_space<vmem>>, %arg3: memref<32x128xf32, #tpu.memory_space<vmem>>, %arg4: memref<1x128xf32, #tpu.memory_space<vmem>>, %arg5: memref<64x128xf32, #tpu.memory_space<vmem>>, %arg6: memref<16x32xf32, #tpu.memory_space<vmem>>, %arg7: memref<128x32xf32, #tpu.memory_space<vmem>>, %arg8: memref<1x32xf32, #tpu.memory_space<vmem>>, %arg9: memref<32x32xf32, #tpu.memory_space<vmem>>, %arg10: memref<1x32xf32, #tpu.memory_space<vmem>>, %arg11: memref<32x2xf32, #tpu.memory_space<vmem>>, %arg12: memref<1x2xf32, #tpu.memory_space<vmem>>, %arg13: memref<2x2xf32, #tpu.memory_space<vmem>>, %arg14: memref<2x128xf32, #tpu.memory_space<vmem>>, %arg15: memref<1xi32, #tpu.memory_space<smem>>) attributes {dimension_semantics = [], scalar_prefetch = 0 : i64, scratch_operands = 2 : i64, tpu.core_type = #tpu.core_type<tc>} {
    %c0 = arith.constant 0 : index
    %c0_0 = arith.constant 0 : index
    %0 = vector.load %arg0[%c0, %c0_0] : memref<2x16xf32, #tpu.memory_space<vmem>>, vector<2x16xf32>
    %c0_1 = arith.constant 0 : index
    %c0_2 = arith.constant 0 : index
    %1 = vector.load %arg1[%c0_1, %c0_2] : memref<16x32xf32, #tpu.memory_space<vmem>>, vector<16x32xf32>
    %cst = arith.constant dense<0.000000e+00> : vector<2x32xf32>
    %2 = tpu.matmul %0, %1, %cst {dimension_numbers = #tpu.dot_dimension_numbers<[1], [0], [0], [1], [0, 0, 1, 1], [], []>} : vector<2x16xf32>, vector<16x32xf32>, vector<2x32xf32> -> vector<2x32xf32>
    %c0_3 = arith.constant 0 : index
    %c0_4 = arith.constant 0 : index
    %3 = vector.load %arg2[%c0_3, %c0_4] : memref<1x32xf32, #tpu.memory_space<vmem>>, vector<1x32xf32>
    %4 = vector.broadcast %3 : vector<1x32xf32> to vector<2x32xf32>
    %5 = arith.addf %2, %4 : vector<2x32xf32>
    %cst_5 = arith.constant 0.000000e+00 : f32
    %6 = vector.broadcast %cst_5 : f32 to vector<2x32xf32>
    %7 = arith.maximumf %5, %6 : vector<2x32xf32>
    %c0_6 = arith.constant 0 : index
    %c0_7 = arith.constant 0 : index
    %8 = vector.load %arg3[%c0_6, %c0_7] : memref<32x128xf32, #tpu.memory_space<vmem>>, vector<32x128xf32>
    %cst_8 = arith.constant dense<0.000000e+00> : vector<2x128xf32>
    %9 = tpu.matmul %7, %8, %cst_8 {dimension_numbers = #tpu.dot_dimension_numbers<[1], [0], [0], [1], [0, 0, 1, 1], [], []>} : vector<2x32xf32>, vector<32x128xf32>, vector<2x128xf32> -> vector<2x128xf32>
    %c0_9 = arith.constant 0 : index
    %c0_10 = arith.constant 0 : index
    %10 = vector.load %arg4[%c0_9, %c0_10] : memref<1x128xf32, #tpu.memory_space<vmem>>, vector<1x128xf32>
    %11 = vector.broadcast %10 : vector<1x128xf32> to vector<2x128xf32>
    %12 = arith.addf %9, %11 : vector<2x128xf32>
    %cst_11 = arith.constant 0.000000e+00 : f32
    %13 = vector.broadcast %cst_11 : f32 to vector<2x128xf32>
    %14 = arith.cmpf ogt, %12, %13 : vector<2x128xf32>
    %cst_12 = arith.constant 1.000000e+00 : f32
    %cst_13 = arith.constant -1.000000e+00 : f32
    %15 = vector.broadcast %cst_12 : f32 to vector<2x128xf32>
    %16 = vector.broadcast %cst_13 : f32 to vector<2x128xf32>
    %17 = arith.select %14, %15, %16 : vector<2x128xi1>, vector<2x128xf32>
    %c0_14 = arith.constant 0 : index
    %c0_15 = arith.constant 0 : index
    %18 = vector.load %arg14[%c0_14, %c0_15] : memref<2x128xf32, #tpu.memory_space<vmem>>, vector<2x128xf32>
    tpu.vector_store %arg14[%c0_14, %c0_15], %17 {strides = array<i32>} : memref<2x128xf32, #tpu.memory_space<vmem>>, vector<2x128xf32>,
    %c1_i32 = arith.constant 1 : i32
    %c0_16 = arith.constant 0 : index
    %19 = memref.load %arg15[%c0_16] : memref<1xi32, #tpu.memory_space<smem>>
    memref.store %c1_i32, %arg15[%c0_16] : memref<1xi32, #tpu.memory_space<smem>>
    %20 = tpu.iota {dimensions = array<i32: 1>} : vector<2x128xi32>
    %c0_i32 = arith.constant 0 : i32
    %c10_i32 = arith.constant 10 : i32
    %21 = arith.addi %c0_i32, %c10_i32 : i32
    %c1_i32_17 = arith.constant 1 : i32
    scf.for %arg16 = %c0_i32 to %21 step %c1_i32_17  : i32 {
      %c0_45 = arith.constant 0 : index
      %51 = memref.load %arg15[%c0_45] : memref<1xi32, #tpu.memory_space<smem>>
      %c0_i32_46 = arith.constant 0 : i32
      %52 = arith.cmpi ne, %51, %c0_i32_46 : i32
      %53 = arith.extui %52 : i1 to i32
      %c0_i32_47 = arith.constant 0 : i32
      %54 = arith.cmpi ne, %53, %c0_i32_47 : i32
      scf.if %54 {
        %c0_48 = arith.constant 0 : index
        %c0_49 = arith.constant 0 : index
        %55 = vector.load %arg14[%c0_48, %c0_49] : memref<2x128xf32, #tpu.memory_space<vmem>>, vector<2x128xf32>
        %c0_50 = arith.constant 0 : index
        %c0_51 = arith.constant 0 : index
        %56 = vector.load %arg5[%c0_50, %c0_51] : memref<64x128xf32, #tpu.memory_space<vmem>>, vector<1x128xf32>
        %57 = vector.broadcast %56 : vector<1x128xf32> to vector<2x128xf32>
        %58 = arith.mulf %55, %57 : vector<2x128xf32>
        %cst_52 = arith.constant dense<0.000000e+00> : vector<2xf32>
        %59 = vector.multi_reduction <add>, %58, %cst_52 [1] : vector<2x128xf32> to vector<2xf32>
        %60 = vector.shape_cast %59 : vector<2xf32> to vector<2x1xf32>
        %cst_53 = arith.constant 0.000000e+00 : f32
        %61 = vector.broadcast %cst_53 : f32 to vector<2x1xf32>
        %62 = arith.cmpf ogt, %60, %61 : vector<2x1xf32>
        %cst_54 = arith.constant 1.000000e+00 : f32
        %cst_55 = arith.constant -1.000000e+00 : f32
        %63 = vector.broadcast %cst_54 : f32 to vector<2x1xf32>
        %64 = vector.broadcast %cst_55 : f32 to vector<2x1xf32>
        %65 = arith.select %62, %63, %64 : vector<2x1xi1>, vector<2x1xf32>
        %c0_i32_56 = arith.constant 0 : i32
        %66 = vector.broadcast %c0_i32_56 : i32 to vector<2x128xi32>
        %67 = arith.cmpi eq, %20, %66 : vector<2x128xi32>
        %68 = vector.shape_cast %65 : vector<2x1xf32> to vector<2x1xf32>
        %69 = vector.broadcast %68 : vector<2x1xf32> to vector<2x128xf32>
        %70 = arith.select %67, %69, %55 : vector<2x128xi1>, vector<2x128xf32>
        %c1 = arith.constant 1 : index
        %c0_57 = arith.constant 0 : index
        %71 = vector.load %arg5[%c1, %c0_57] : memref<64x128xf32, #tpu.memory_space<vmem>>, vector<1x128xf32>
        %72 = vector.broadcast %71 : vector<1x128xf32> to vector<2x128xf32>
        %73 = arith.mulf %70, %72 : vector<2x128xf32>
        %cst_58 = arith.constant dense<0.000000e+00> : vector<2xf32>
        %74 = vector.multi_reduction <add>, %73, %cst_58 [1] : vector<2x128xf32> to vector<2xf32>
        %75 = vector.shape_cast %74 : vector<2xf32> to vector<2x1xf32>
        %cst_59 = arith.constant 0.000000e+00 : f32
        %76 = vector.broadcast %cst_59 : f32 to vector<2x1xf32>
        %77 = arith.cmpf ogt, %75, %76 : vector<2x1xf32>
        %cst_60 = arith.constant 1.000000e+00 : f32
        %cst_61 = arith.constant -1.000000e+00 : f32
        %78 = vector.broadcast %cst_60 : f32 to vector<2x1xf32>
        %79 = vector.broadcast %cst_61 : f32 to vector<2x1xf32>
        %80 = arith.select %77, %78, %79 : vector<2x1xi1>, vector<2x1xf32>
        %c1_i32_62 = arith.constant 1 : i32
        %81 = vector.broadcast %c1_i32_62 : i32 to vector<2x128xi32>
        %82 = arith.cmpi eq, %20, %81 : vector<2x128xi32>
        %83 = vector.shape_cast %80 : vector<2x1xf32> to vector<2x1xf32>
        %84 = vector.broadcast %83 : vector<2x1xf32> to vector<2x128xf32>
        %85 = arith.select %82, %84, %70 : vector<2x128xi1>, vector<2x128xf32>
        %c2 = arith.constant 2 : index
        %c0_63 = arith.constant 0 : index
        %86 = vector.load %arg5[%c2, %c0_63] : memref<64x128xf32, #tpu.memory_space<vmem>>, vector<1x128xf32>
        %87 = vector.broadcast %86 : vector<1x128xf32> to vector<2x128xf32>
        %88 = arith.mulf %85, %87 : vector<2x128xf32>
        %cst_64 = arith.constant dense<0.000000e+00> : vector<2xf32>
        %89 = vector.multi_reduction <add>, %88, %cst_64 [1] : vector<2x128xf32> to vector<2xf32>
        %90 = vector.shape_cast %89 : vector<2xf32> to vector<2x1xf32>
        %cst_65 = arith.constant 0.000000e+00 : f32
        %91 = vector.broadcast %cst_65 : f32 to vector<2x1xf32>
        %92 = arith.cmpf ogt, %90, %91 : vector<2x1xf32>
        %cst_66 = arith.constant 1.000000e+00 : f32
        %cst_67 = arith.constant -1.000000e+00 : f32
        %93 = vector.broadcast %cst_66 : f32 to vector<2x1xf32>
        %94 = vector.broadcast %cst_67 : f32 to vector<2x1xf32>
        %95 = arith.select %92, %93, %94 : vector<2x1xi1>, vector<2x1xf32>
        %c2_i32 = arith.constant 2 : i32
        %96 = vector.broadcast %c2_i32 : i32 to vector<2x128xi32>
        %97 = arith.cmpi eq, %20, %96 : vector<2x128xi32>
        %98 = vector.shape_cast %95 : vector<2x1xf32> to vector<2x1xf32>
        %99 = vector.broadcast %98 : vector<2x1xf32> to vector<2x128xf32>
        %100 = arith.select %97, %99, %85 : vector<2x128xi1>, vector<2x128xf32>
        %c3 = arith.constant 3 : index
        %c0_68 = arith.constant 0 : index
        %101 = vector.load %arg5[%c3, %c0_68] : memref<64x128xf32, #tpu.memory_space<vmem>>, vector<1x128xf32>
        %102 = vector.broadcast %101 : vector<1x128xf32> to vector<2x128xf32>
        %103 = arith.mulf %100, %102 : vector<2x128xf32>
        %cst_69 = arith.constant dense<0.000000e+00> : vector<2xf32>
        %104 = vector.multi_reduction <add>, %103, %cst_69 [1] : vector<2x128xf32> to vector<2xf32>
        %105 = vector.shape_cast %104 : vector<2xf32> to vector<2x1xf32>
        %cst_70 = arith.constant 0.000000e+00 : f32
        %106 = vector.broadcast %cst_70 : f32 to vector<2x1xf32>
        %107 = arith.cmpf ogt, %105, %106 : vector<2x1xf32>
        %cst_71 = arith.constant 1.000000e+00 : f32
        %cst_72 = arith.constant -1.000000e+00 : f32
        %108 = vector.broadcast %cst_71 : f32 to vector<2x1xf32>
        %109 = vector.broadcast %cst_72 : f32 to vector<2x1xf32>
        %110 = arith.select %107, %108, %109 : vector<2x1xi1>, vector<2x1xf32>
        %c3_i32 = arith.constant 3 : i32
        %111 = vector.broadcast %c3_i32 : i32 to vector<2x128xi32>
        %112 = arith.cmpi eq, %20, %111 : vector<2x128xi32>
        %113 = vector.shape_cast %110 : vector<2x1xf32> to vector<2x1xf32>
        %114 = vector.broadcast %113 : vector<2x1xf32> to vector<2x128xf32>
        %115 = arith.select %112, %114, %100 : vector<2x128xi1>, vector<2x128xf32>
        %c4 = arith.constant 4 : index
        %c0_73 = arith.constant 0 : index
        %116 = vector.load %arg5[%c4, %c0_73] : memref<64x128xf32, #tpu.memory_space<vmem>>, vector<1x128xf32>
        %117 = vector.broadcast %116 : vector<1x128xf32> to vector<2x128xf32>
        %118 = arith.mulf %115, %117 : vector<2x128xf32>
        %cst_74 = arith.constant dense<0.000000e+00> : vector<2xf32>
        %119 = vector.multi_reduction <add>, %118, %cst_74 [1] : vector<2x128xf32> to vector<2xf32>
        %120 = vector.shape_cast %119 : vector<2xf32> to vector<2x1xf32>
        %cst_75 = arith.constant 0.000000e+00 : f32
        %121 = vector.broadcast %cst_75 : f32 to vector<2x1xf32>
        %122 = arith.cmpf ogt, %120, %121 : vector<2x1xf32>
        %cst_76 = arith.constant 1.000000e+00 : f32
        %cst_77 = arith.constant -1.000000e+00 : f32
        %123 = vector.broadcast %cst_76 : f32 to vector<2x1xf32>
        %124 = vector.broadcast %cst_77 : f32 to vector<2x1xf32>
        %125 = arith.select %122, %123, %124 : vector<2x1xi1>, vector<2x1xf32>
        %c4_i32 = arith.constant 4 : i32
        %126 = vector.broadcast %c4_i32 : i32 to vector<2x128xi32>
        %127 = arith.cmpi eq, %20, %126 : vector<2x128xi32>
        %128 = vector.shape_cast %125 : vector<2x1xf32> to vector<2x1xf32>
        %129 = vector.broadcast %128 : vector<2x1xf32> to vector<2x128xf32>
        %130 = arith.select %127, %129, %115 : vector<2x128xi1>, vector<2x128xf32>
        %c5 = arith.constant 5 : index
        %c0_78 = arith.constant 0 : index
        %131 = vector.load %arg5[%c5, %c0_78] : memref<64x128xf32, #tpu.memory_space<vmem>>, vector<1x128xf32>
        %132 = vector.broadcast %131 : vector<1x128xf32> to vector<2x128xf32>
        %133 = arith.mulf %130, %132 : vector<2x128xf32>
        %cst_79 = arith.constant dense<0.000000e+00> : vector<2xf32>
        %134 = vector.multi_reduction <add>, %133, %cst_79 [1] : vector<2x128xf32> to vector<2xf32>
        %135 = vector.shape_cast %134 : vector<2xf32> to vector<2x1xf32>
        %cst_80 = arith.constant 0.000000e+00 : f32
        %136 = vector.broadcast %cst_80 : f32 to vector<2x1xf32>
        %137 = arith.cmpf ogt, %135, %136 : vector<2x1xf32>
        %cst_81 = arith.constant 1.000000e+00 : f32
        %cst_82 = arith.constant -1.000000e+00 : f32
        %138 = vector.broadcast %cst_81 : f32 to vector<2x1xf32>
        %139 = vector.broadcast %cst_82 : f32 to vector<2x1xf32>
        %140 = arith.select %137, %138, %139 : vector<2x1xi1>, vector<2x1xf32>
        %c5_i32 = arith.constant 5 : i32
        %141 = vector.broadcast %c5_i32 : i32 to vector<2x128xi32>
        %142 = arith.cmpi eq, %20, %141 : vector<2x128xi32>
        %143 = vector.shape_cast %140 : vector<2x1xf32> to vector<2x1xf32>
        %144 = vector.broadcast %143 : vector<2x1xf32> to vector<2x128xf32>
        %145 = arith.select %142, %144, %130 : vector<2x128xi1>, vector<2x128xf32>
        %c6 = arith.constant 6 : index
        %c0_83 = arith.constant 0 : index
        %146 = vector.load %arg5[%c6, %c0_83] : memref<64x128xf32, #tpu.memory_space<vmem>>, vector<1x128xf32>
        %147 = vector.broadcast %146 : vector<1x128xf32> to vector<2x128xf32>
        %148 = arith.mulf %145, %147 : vector<2x128xf32>
        %cst_84 = arith.constant dense<0.000000e+00> : vector<2xf32>
        %149 = vector.multi_reduction <add>, %148, %cst_84 [1] : vector<2x128xf32> to vector<2xf32>
        %150 = vector.shape_cast %149 : vector<2xf32> to vector<2x1xf32>
        %cst_85 = arith.constant 0.000000e+00 : f32
        %151 = vector.broadcast %cst_85 : f32 to vector<2x1xf32>
        %152 = arith.cmpf ogt, %150, %151 : vector<2x1xf32>
        %cst_86 = arith.constant 1.000000e+00 : f32
        %cst_87 = arith.constant -1.000000e+00 : f32
        %153 = vector.broadcast %cst_86 : f32 to vector<2x1xf32>
        %154 = vector.broadcast %cst_87 : f32 to vector<2x1xf32>
        %155 = arith.select %152, %153, %154 : vector<2x1xi1>, vector<2x1xf32>
        %c6_i32 = arith.constant 6 : i32
        %156 = vector.broadcast %c6_i32 : i32 to vector<2x128xi32>
        %157 = arith.cmpi eq, %20, %156 : vector<2x128xi32>
        %158 = vector.shape_cast %155 : vector<2x1xf32> to vector<2x1xf32>
        %159 = vector.broadcast %158 : vector<2x1xf32> to vector<2x128xf32>
        %160 = arith.select %157, %159, %145 : vector<2x128xi1>, vector<2x128xf32>
        %c7 = arith.constant 7 : index
        %c0_88 = arith.constant 0 : index
        %161 = vector.load %arg5[%c7, %c0_88] : memref<64x128xf32, #tpu.memory_space<vmem>>, vector<1x128xf32>
        %162 = vector.broadcast %161 : vector<1x128xf32> to vector<2x128xf32>
        %163 = arith.mulf %160, %162 : vector<2x128xf32>
        %cst_89 = arith.constant dense<0.000000e+00> : vector<2xf32>
        %164 = vector.multi_reduction <add>, %163, %cst_89 [1] : vector<2x128xf32> to vector<2xf32>
        %165 = vector.shape_cast %164 : vector<2xf32> to vector<2x1xf32>
        %cst_90 = arith.constant 0.000000e+00 : f32
        %166 = vector.broadcast %cst_90 : f32 to vector<2x1xf32>
        %167 = arith.cmpf ogt, %165, %166 : vector<2x1xf32>
        %cst_91 = arith.constant 1.000000e+00 : f32
        %cst_92 = arith.constant -1.000000e+00 : f32
        %168 = vector.broadcast %cst_91 : f32 to vector<2x1xf32>
        %169 = vector.broadcast %cst_92 : f32 to vector<2x1xf32>
        %170 = arith.select %167, %168, %169 : vector<2x1xi1>, vector<2x1xf32>
        %c7_i32 = arith.constant 7 : i32
        %171 = vector.broadcast %c7_i32 : i32 to vector<2x128xi32>
        %172 = arith.cmpi eq, %20, %171 : vector<2x128xi32>
        %173 = vector.shape_cast %170 : vector<2x1xf32> to vector<2x1xf32>
        %174 = vector.broadcast %173 : vector<2x1xf32> to vector<2x128xf32>
        %175 = arith.select %172, %174, %160 : vector<2x128xi1>, vector<2x128xf32>
        %c8 = arith.constant 8 : index
        %c0_93 = arith.constant 0 : index
        %176 = vector.load %arg5[%c8, %c0_93] : memref<64x128xf32, #tpu.memory_space<vmem>>, vector<1x128xf32>
        %177 = vector.broadcast %176 : vector<1x128xf32> to vector<2x128xf32>
        %178 = arith.mulf %175, %177 : vector<2x128xf32>
        %cst_94 = arith.constant dense<0.000000e+00> : vector<2xf32>
        %179 = vector.multi_reduction <add>, %178, %cst_94 [1] : vector<2x128xf32> to vector<2xf32>
        %180 = vector.shape_cast %179 : vector<2xf32> to vector<2x1xf32>
        %cst_95 = arith.constant 0.000000e+00 : f32
        %181 = vector.broadcast %cst_95 : f32 to vector<2x1xf32>
        %182 = arith.cmpf ogt, %180, %181 : vector<2x1xf32>
        %cst_96 = arith.constant 1.000000e+00 : f32
        %cst_97 = arith.constant -1.000000e+00 : f32
        %183 = vector.broadcast %cst_96 : f32 to vector<2x1xf32>
        %184 = vector.broadcast %cst_97 : f32 to vector<2x1xf32>
        %185 = arith.select %182, %183, %184 : vector<2x1xi1>, vector<2x1xf32>
        %c8_i32 = arith.constant 8 : i32
        %186 = vector.broadcast %c8_i32 : i32 to vector<2x128xi32>
        %187 = arith.cmpi eq, %20, %186 : vector<2x128xi32>
        %188 = vector.shape_cast %185 : vector<2x1xf32> to vector<2x1xf32>
        %189 = vector.broadcast %188 : vector<2x1xf32> to vector<2x128xf32>
        %190 = arith.select %187, %189, %175 : vector<2x128xi1>, vector<2x128xf32>
        %c9 = arith.constant 9 : index
        %c0_98 = arith.constant 0 : index
        %191 = vector.load %arg5[%c9, %c0_98] : memref<64x128xf32, #tpu.memory_space<vmem>>, vector<1x128xf32>
        %192 = vector.broadcast %191 : vector<1x128xf32> to vector<2x128xf32>
        %193 = arith.mulf %190, %192 : vector<2x128xf32>
        %cst_99 = arith.constant dense<0.000000e+00> : vector<2xf32>
        %194 = vector.multi_reduction <add>, %193, %cst_99 [1] : vector<2x128xf32> to vector<2xf32>
        %195 = vector.shape_cast %194 : vector<2xf32> to vector<2x1xf32>
        %cst_100 = arith.constant 0.000000e+00 : f32
        %196 = vector.broadcast %cst_100 : f32 to vector<2x1xf32>
        %197 = arith.cmpf ogt, %195, %196 : vector<2x1xf32>
        %cst_101 = arith.constant 1.000000e+00 : f32
        %cst_102 = arith.constant -1.000000e+00 : f32
        %198 = vector.broadcast %cst_101 : f32 to vector<2x1xf32>
        %199 = vector.broadcast %cst_102 : f32 to vector<2x1xf32>
        %200 = arith.select %197, %198, %199 : vector<2x1xi1>, vector<2x1xf32>
        %c9_i32 = arith.constant 9 : i32
        %201 = vector.broadcast %c9_i32 : i32 to vector<2x128xi32>
        %202 = arith.cmpi eq, %20, %201 : vector<2x128xi32>
        %203 = vector.shape_cast %200 : vector<2x1xf32> to vector<2x1xf32>
        %204 = vector.broadcast %203 : vector<2x1xf32> to vector<2x128xf32>
        %205 = arith.select %202, %204, %190 : vector<2x128xi1>, vector<2x128xf32>
        %c10 = arith.constant 10 : index
        %c0_103 = arith.constant 0 : index
        %206 = vector.load %arg5[%c10, %c0_103] : memref<64x128xf32, #tpu.memory_space<vmem>>, vector<1x128xf32>
        %207 = vector.broadcast %206 : vector<1x128xf32> to vector<2x128xf32>
        %208 = arith.mulf %205, %207 : vector<2x128xf32>
        %cst_104 = arith.constant dense<0.000000e+00> : vector<2xf32>
        %209 = vector.multi_reduction <add>, %208, %cst_104 [1] : vector<2x128xf32> to vector<2xf32>
        %210 = vector.shape_cast %209 : vector<2xf32> to vector<2x1xf32>
        %cst_105 = arith.constant 0.000000e+00 : f32
        %211 = vector.broadcast %cst_105 : f32 to vector<2x1xf32>
        %212 = arith.cmpf ogt, %210, %211 : vector<2x1xf32>
        %cst_106 = arith.constant 1.000000e+00 : f32
        %cst_107 = arith.constant -1.000000e+00 : f32
        %213 = vector.broadcast %cst_106 : f32 to vector<2x1xf32>
        %214 = vector.broadcast %cst_107 : f32 to vector<2x1xf32>
        %215 = arith.select %212, %213, %214 : vector<2x1xi1>, vector<2x1xf32>
        %c10_i32_108 = arith.constant 10 : i32
        %216 = vector.broadcast %c10_i32_108 : i32 to vector<2x128xi32>
        %217 = arith.cmpi eq, %20, %216 : vector<2x128xi32>
        %218 = vector.shape_cast %215 : vector<2x1xf32> to vector<2x1xf32>
        %219 = vector.broadcast %218 : vector<2x1xf32> to vector<2x128xf32>
        %220 = arith.select %217, %219, %205 : vector<2x128xi1>, vector<2x128xf32>
        %c11 = arith.constant 11 : index
        %c0_109 = arith.constant 0 : index
        %221 = vector.load %arg5[%c11, %c0_109] : memref<64x128xf32, #tpu.memory_space<vmem>>, vector<1x128xf32>
        %222 = vector.broadcast %221 : vector<1x128xf32> to vector<2x128xf32>
        %223 = arith.mulf %220, %222 : vector<2x128xf32>
        %cst_110 = arith.constant dense<0.000000e+00> : vector<2xf32>
        %224 = vector.multi_reduction <add>, %223, %cst_110 [1] : vector<2x128xf32> to vector<2xf32>
        %225 = vector.shape_cast %224 : vector<2xf32> to vector<2x1xf32>
        %cst_111 = arith.constant 0.000000e+00 : f32
        %226 = vector.broadcast %cst_111 : f32 to vector<2x1xf32>
        %227 = arith.cmpf ogt, %225, %226 : vector<2x1xf32>
        %cst_112 = arith.constant 1.000000e+00 : f32
        %cst_113 = arith.constant -1.000000e+00 : f32
        %228 = vector.broadcast %cst_112 : f32 to vector<2x1xf32>
        %229 = vector.broadcast %cst_113 : f32 to vector<2x1xf32>
        %230 = arith.select %227, %228, %229 : vector<2x1xi1>, vector<2x1xf32>
        %c11_i32 = arith.constant 11 : i32
        %231 = vector.broadcast %c11_i32 : i32 to vector<2x128xi32>
        %232 = arith.cmpi eq, %20, %231 : vector<2x128xi32>
        %233 = vector.shape_cast %230 : vector<2x1xf32> to vector<2x1xf32>
        %234 = vector.broadcast %233 : vector<2x1xf32> to vector<2x128xf32>
        %235 = arith.select %232, %234, %220 : vector<2x128xi1>, vector<2x128xf32>
        %c12 = arith.constant 12 : index
        %c0_114 = arith.constant 0 : index
        %236 = vector.load %arg5[%c12, %c0_114] : memref<64x128xf32, #tpu.memory_space<vmem>>, vector<1x128xf32>
        %237 = vector.broadcast %236 : vector<1x128xf32> to vector<2x128xf32>
        %238 = arith.mulf %235, %237 : vector<2x128xf32>
        %cst_115 = arith.constant dense<0.000000e+00> : vector<2xf32>
        %239 = vector.multi_reduction <add>, %238, %cst_115 [1] : vector<2x128xf32> to vector<2xf32>
        %240 = vector.shape_cast %239 : vector<2xf32> to vector<2x1xf32>
        %cst_116 = arith.constant 0.000000e+00 : f32
        %241 = vector.broadcast %cst_116 : f32 to vector<2x1xf32>
        %242 = arith.cmpf ogt, %240, %241 : vector<2x1xf32>
        %cst_117 = arith.constant 1.000000e+00 : f32
        %cst_118 = arith.constant -1.000000e+00 : f32
        %243 = vector.broadcast %cst_117 : f32 to vector<2x1xf32>
        %244 = vector.broadcast %cst_118 : f32 to vector<2x1xf32>
        %245 = arith.select %242, %243, %244 : vector<2x1xi1>, vector<2x1xf32>
        %c12_i32 = arith.constant 12 : i32
        %246 = vector.broadcast %c12_i32 : i32 to vector<2x128xi32>
        %247 = arith.cmpi eq, %20, %246 : vector<2x128xi32>
        %248 = vector.shape_cast %245 : vector<2x1xf32> to vector<2x1xf32>
        %249 = vector.broadcast %248 : vector<2x1xf32> to vector<2x128xf32>
        %250 = arith.select %247, %249, %235 : vector<2x128xi1>, vector<2x128xf32>
        %c13 = arith.constant 13 : index
        %c0_119 = arith.constant 0 : index
        %251 = vector.load %arg5[%c13, %c0_119] : memref<64x128xf32, #tpu.memory_space<vmem>>, vector<1x128xf32>
        %252 = vector.broadcast %251 : vector<1x128xf32> to vector<2x128xf32>
        %253 = arith.mulf %250, %252 : vector<2x128xf32>
        %cst_120 = arith.constant dense<0.000000e+00> : vector<2xf32>
        %254 = vector.multi_reduction <add>, %253, %cst_120 [1] : vector<2x128xf32> to vector<2xf32>
        %255 = vector.shape_cast %254 : vector<2xf32> to vector<2x1xf32>
        %cst_121 = arith.constant 0.000000e+00 : f32
        %256 = vector.broadcast %cst_121 : f32 to vector<2x1xf32>
        %257 = arith.cmpf ogt, %255, %256 : vector<2x1xf32>
        %cst_122 = arith.constant 1.000000e+00 : f32
        %cst_123 = arith.constant -1.000000e+00 : f32
        %258 = vector.broadcast %cst_122 : f32 to vector<2x1xf32>
        %259 = vector.broadcast %cst_123 : f32 to vector<2x1xf32>
        %260 = arith.select %257, %258, %259 : vector<2x1xi1>, vector<2x1xf32>
        %c13_i32 = arith.constant 13 : i32
        %261 = vector.broadcast %c13_i32 : i32 to vector<2x128xi32>
        %262 = arith.cmpi eq, %20, %261 : vector<2x128xi32>
        %263 = vector.shape_cast %260 : vector<2x1xf32> to vector<2x1xf32>
        %264 = vector.broadcast %263 : vector<2x1xf32> to vector<2x128xf32>
        %265 = arith.select %262, %264, %250 : vector<2x128xi1>, vector<2x128xf32>
        %c14 = arith.constant 14 : index
        %c0_124 = arith.constant 0 : index
        %266 = vector.load %arg5[%c14, %c0_124] : memref<64x128xf32, #tpu.memory_space<vmem>>, vector<1x128xf32>
        %267 = vector.broadcast %266 : vector<1x128xf32> to vector<2x128xf32>
        %268 = arith.mulf %265, %267 : vector<2x128xf32>
        %cst_125 = arith.constant dense<0.000000e+00> : vector<2xf32>
        %269 = vector.multi_reduction <add>, %268, %cst_125 [1] : vector<2x128xf32> to vector<2xf32>
        %270 = vector.shape_cast %269 : vector<2xf32> to vector<2x1xf32>
        %cst_126 = arith.constant 0.000000e+00 : f32
        %271 = vector.broadcast %cst_126 : f32 to vector<2x1xf32>
        %272 = arith.cmpf ogt, %270, %271 : vector<2x1xf32>
        %cst_127 = arith.constant 1.000000e+00 : f32
        %cst_128 = arith.constant -1.000000e+00 : f32
        %273 = vector.broadcast %cst_127 : f32 to vector<2x1xf32>
        %274 = vector.broadcast %cst_128 : f32 to vector<2x1xf32>
        %275 = arith.select %272, %273, %274 : vector<2x1xi1>, vector<2x1xf32>
        %c14_i32 = arith.constant 14 : i32
        %276 = vector.broadcast %c14_i32 : i32 to vector<2x128xi32>
        %277 = arith.cmpi eq, %20, %276 : vector<2x128xi32>
        %278 = vector.shape_cast %275 : vector<2x1xf32> to vector<2x1xf32>
        %279 = vector.broadcast %278 : vector<2x1xf32> to vector<2x128xf32>
        %280 = arith.select %277, %279, %265 : vector<2x128xi1>, vector<2x128xf32>
        %c15 = arith.constant 15 : index
        %c0_129 = arith.constant 0 : index
        %281 = vector.load %arg5[%c15, %c0_129] : memref<64x128xf32, #tpu.memory_space<vmem>>, vector<1x128xf32>
        %282 = vector.broadcast %281 : vector<1x128xf32> to vector<2x128xf32>
        %283 = arith.mulf %280, %282 : vector<2x128xf32>
        %cst_130 = arith.constant dense<0.000000e+00> : vector<2xf32>
        %284 = vector.multi_reduction <add>, %283, %cst_130 [1] : vector<2x128xf32> to vector<2xf32>
        %285 = vector.shape_cast %284 : vector<2xf32> to vector<2x1xf32>
        %cst_131 = arith.constant 0.000000e+00 : f32
        %286 = vector.broadcast %cst_131 : f32 to vector<2x1xf32>
        %287 = arith.cmpf ogt, %285, %286 : vector<2x1xf32>
        %cst_132 = arith.constant 1.000000e+00 : f32
        %cst_133 = arith.constant -1.000000e+00 : f32
        %288 = vector.broadcast %cst_132 : f32 to vector<2x1xf32>
        %289 = vector.broadcast %cst_133 : f32 to vector<2x1xf32>
        %290 = arith.select %287, %288, %289 : vector<2x1xi1>, vector<2x1xf32>
        %c15_i32 = arith.constant 15 : i32
        %291 = vector.broadcast %c15_i32 : i32 to vector<2x128xi32>
        %292 = arith.cmpi eq, %20, %291 : vector<2x128xi32>
        %293 = vector.shape_cast %290 : vector<2x1xf32> to vector<2x1xf32>
        %294 = vector.broadcast %293 : vector<2x1xf32> to vector<2x128xf32>
        %295 = arith.select %292, %294, %280 : vector<2x128xi1>, vector<2x128xf32>
        %c16 = arith.constant 16 : index
        %c0_134 = arith.constant 0 : index
        %296 = vector.load %arg5[%c16, %c0_134] : memref<64x128xf32, #tpu.memory_space<vmem>>, vector<1x128xf32>
        %297 = vector.broadcast %296 : vector<1x128xf32> to vector<2x128xf32>
        %298 = arith.mulf %295, %297 : vector<2x128xf32>
        %cst_135 = arith.constant dense<0.000000e+00> : vector<2xf32>
        %299 = vector.multi_reduction <add>, %298, %cst_135 [1] : vector<2x128xf32> to vector<2xf32>
        %300 = vector.shape_cast %299 : vector<2xf32> to vector<2x1xf32>
        %cst_136 = arith.constant 0.000000e+00 : f32
        %301 = vector.broadcast %cst_136 : f32 to vector<2x1xf32>
        %302 = arith.cmpf ogt, %300, %301 : vector<2x1xf32>
        %cst_137 = arith.constant 1.000000e+00 : f32
        %cst_138 = arith.constant -1.000000e+00 : f32
        %303 = vector.broadcast %cst_137 : f32 to vector<2x1xf32>
        %304 = vector.broadcast %cst_138 : f32 to vector<2x1xf32>
        %305 = arith.select %302, %303, %304 : vector<2x1xi1>, vector<2x1xf32>
        %c16_i32 = arith.constant 16 : i32
        %306 = vector.broadcast %c16_i32 : i32 to vector<2x128xi32>
        %307 = arith.cmpi eq, %20, %306 : vector<2x128xi32>
        %308 = vector.shape_cast %305 : vector<2x1xf32> to vector<2x1xf32>
        %309 = vector.broadcast %308 : vector<2x1xf32> to vector<2x128xf32>
        %310 = arith.select %307, %309, %295 : vector<2x128xi1>, vector<2x128xf32>
        %c17 = arith.constant 17 : index
        %c0_139 = arith.constant 0 : index
        %311 = vector.load %arg5[%c17, %c0_139] : memref<64x128xf32, #tpu.memory_space<vmem>>, vector<1x128xf32>
        %312 = vector.broadcast %311 : vector<1x128xf32> to vector<2x128xf32>
        %313 = arith.mulf %310, %312 : vector<2x128xf32>
        %cst_140 = arith.constant dense<0.000000e+00> : vector<2xf32>
        %314 = vector.multi_reduction <add>, %313, %cst_140 [1] : vector<2x128xf32> to vector<2xf32>
        %315 = vector.shape_cast %314 : vector<2xf32> to vector<2x1xf32>
        %cst_141 = arith.constant 0.000000e+00 : f32
        %316 = vector.broadcast %cst_141 : f32 to vector<2x1xf32>
        %317 = arith.cmpf ogt, %315, %316 : vector<2x1xf32>
        %cst_142 = arith.constant 1.000000e+00 : f32
        %cst_143 = arith.constant -1.000000e+00 : f32
        %318 = vector.broadcast %cst_142 : f32 to vector<2x1xf32>
        %319 = vector.broadcast %cst_143 : f32 to vector<2x1xf32>
        %320 = arith.select %317, %318, %319 : vector<2x1xi1>, vector<2x1xf32>
        %c17_i32 = arith.constant 17 : i32
        %321 = vector.broadcast %c17_i32 : i32 to vector<2x128xi32>
        %322 = arith.cmpi eq, %20, %321 : vector<2x128xi32>
        %323 = vector.shape_cast %320 : vector<2x1xf32> to vector<2x1xf32>
        %324 = vector.broadcast %323 : vector<2x1xf32> to vector<2x128xf32>
        %325 = arith.select %322, %324, %310 : vector<2x128xi1>, vector<2x128xf32>
        %c18 = arith.constant 18 : index
        %c0_144 = arith.constant 0 : index
        %326 = vector.load %arg5[%c18, %c0_144] : memref<64x128xf32, #tpu.memory_space<vmem>>, vector<1x128xf32>
        %327 = vector.broadcast %326 : vector<1x128xf32> to vector<2x128xf32>
        %328 = arith.mulf %325, %327 : vector<2x128xf32>
        %cst_145 = arith.constant dense<0.000000e+00> : vector<2xf32>
        %329 = vector.multi_reduction <add>, %328, %cst_145 [1] : vector<2x128xf32> to vector<2xf32>
        %330 = vector.shape_cast %329 : vector<2xf32> to vector<2x1xf32>
        %cst_146 = arith.constant 0.000000e+00 : f32
        %331 = vector.broadcast %cst_146 : f32 to vector<2x1xf32>
        %332 = arith.cmpf ogt, %330, %331 : vector<2x1xf32>
        %cst_147 = arith.constant 1.000000e+00 : f32
        %cst_148 = arith.constant -1.000000e+00 : f32
        %333 = vector.broadcast %cst_147 : f32 to vector<2x1xf32>
        %334 = vector.broadcast %cst_148 : f32 to vector<2x1xf32>
        %335 = arith.select %332, %333, %334 : vector<2x1xi1>, vector<2x1xf32>
        %c18_i32 = arith.constant 18 : i32
        %336 = vector.broadcast %c18_i32 : i32 to vector<2x128xi32>
        %337 = arith.cmpi eq, %20, %336 : vector<2x128xi32>
        %338 = vector.shape_cast %335 : vector<2x1xf32> to vector<2x1xf32>
        %339 = vector.broadcast %338 : vector<2x1xf32> to vector<2x128xf32>
        %340 = arith.select %337, %339, %325 : vector<2x128xi1>, vector<2x128xf32>
        %c19 = arith.constant 19 : index
        %c0_149 = arith.constant 0 : index
        %341 = vector.load %arg5[%c19, %c0_149] : memref<64x128xf32, #tpu.memory_space<vmem>>, vector<1x128xf32>
        %342 = vector.broadcast %341 : vector<1x128xf32> to vector<2x128xf32>
        %343 = arith.mulf %340, %342 : vector<2x128xf32>
        %cst_150 = arith.constant dense<0.000000e+00> : vector<2xf32>
        %344 = vector.multi_reduction <add>, %343, %cst_150 [1] : vector<2x128xf32> to vector<2xf32>
        %345 = vector.shape_cast %344 : vector<2xf32> to vector<2x1xf32>
        %cst_151 = arith.constant 0.000000e+00 : f32
        %346 = vector.broadcast %cst_151 : f32 to vector<2x1xf32>
        %347 = arith.cmpf ogt, %345, %346 : vector<2x1xf32>
        %cst_152 = arith.constant 1.000000e+00 : f32
        %cst_153 = arith.constant -1.000000e+00 : f32
        %348 = vector.broadcast %cst_152 : f32 to vector<2x1xf32>
        %349 = vector.broadcast %cst_153 : f32 to vector<2x1xf32>
        %350 = arith.select %347, %348, %349 : vector<2x1xi1>, vector<2x1xf32>
        %c19_i32 = arith.constant 19 : i32
        %351 = vector.broadcast %c19_i32 : i32 to vector<2x128xi32>
        %352 = arith.cmpi eq, %20, %351 : vector<2x128xi32>
        %353 = vector.shape_cast %350 : vector<2x1xf32> to vector<2x1xf32>
        %354 = vector.broadcast %353 : vector<2x1xf32> to vector<2x128xf32>
        %355 = arith.select %352, %354, %340 : vector<2x128xi1>, vector<2x128xf32>
        %c20 = arith.constant 20 : index
        %c0_154 = arith.constant 0 : index
        %356 = vector.load %arg5[%c20, %c0_154] : memref<64x128xf32, #tpu.memory_space<vmem>>, vector<1x128xf32>
        %357 = vector.broadcast %356 : vector<1x128xf32> to vector<2x128xf32>
        %358 = arith.mulf %355, %357 : vector<2x128xf32>
        %cst_155 = arith.constant dense<0.000000e+00> : vector<2xf32>
        %359 = vector.multi_reduction <add>, %358, %cst_155 [1] : vector<2x128xf32> to vector<2xf32>
        %360 = vector.shape_cast %359 : vector<2xf32> to vector<2x1xf32>
        %cst_156 = arith.constant 0.000000e+00 : f32
        %361 = vector.broadcast %cst_156 : f32 to vector<2x1xf32>
        %362 = arith.cmpf ogt, %360, %361 : vector<2x1xf32>
        %cst_157 = arith.constant 1.000000e+00 : f32
        %cst_158 = arith.constant -1.000000e+00 : f32
        %363 = vector.broadcast %cst_157 : f32 to vector<2x1xf32>
        %364 = vector.broadcast %cst_158 : f32 to vector<2x1xf32>
        %365 = arith.select %362, %363, %364 : vector<2x1xi1>, vector<2x1xf32>
        %c20_i32 = arith.constant 20 : i32
        %366 = vector.broadcast %c20_i32 : i32 to vector<2x128xi32>
        %367 = arith.cmpi eq, %20, %366 : vector<2x128xi32>
        %368 = vector.shape_cast %365 : vector<2x1xf32> to vector<2x1xf32>
        %369 = vector.broadcast %368 : vector<2x1xf32> to vector<2x128xf32>
        %370 = arith.select %367, %369, %355 : vector<2x128xi1>, vector<2x128xf32>
        %c21 = arith.constant 21 : index
        %c0_159 = arith.constant 0 : index
        %371 = vector.load %arg5[%c21, %c0_159] : memref<64x128xf32, #tpu.memory_space<vmem>>, vector<1x128xf32>
        %372 = vector.broadcast %371 : vector<1x128xf32> to vector<2x128xf32>
        %373 = arith.mulf %370, %372 : vector<2x128xf32>
        %cst_160 = arith.constant dense<0.000000e+00> : vector<2xf32>
        %374 = vector.multi_reduction <add>, %373, %cst_160 [1] : vector<2x128xf32> to vector<2xf32>
        %375 = vector.shape_cast %374 : vector<2xf32> to vector<2x1xf32>
        %cst_161 = arith.constant 0.000000e+00 : f32
        %376 = vector.broadcast %cst_161 : f32 to vector<2x1xf32>
        %377 = arith.cmpf ogt, %375, %376 : vector<2x1xf32>
        %cst_162 = arith.constant 1.000000e+00 : f32
        %cst_163 = arith.constant -1.000000e+00 : f32
        %378 = vector.broadcast %cst_162 : f32 to vector<2x1xf32>
        %379 = vector.broadcast %cst_163 : f32 to vector<2x1xf32>
        %380 = arith.select %377, %378, %379 : vector<2x1xi1>, vector<2x1xf32>
        %c21_i32 = arith.constant 21 : i32
        %381 = vector.broadcast %c21_i32 : i32 to vector<2x128xi32>
        %382 = arith.cmpi eq, %20, %381 : vector<2x128xi32>
        %383 = vector.shape_cast %380 : vector<2x1xf32> to vector<2x1xf32>
        %384 = vector.broadcast %383 : vector<2x1xf32> to vector<2x128xf32>
        %385 = arith.select %382, %384, %370 : vector<2x128xi1>, vector<2x128xf32>
        %c22 = arith.constant 22 : index
        %c0_164 = arith.constant 0 : index
        %386 = vector.load %arg5[%c22, %c0_164] : memref<64x128xf32, #tpu.memory_space<vmem>>, vector<1x128xf32>
        %387 = vector.broadcast %386 : vector<1x128xf32> to vector<2x128xf32>
        %388 = arith.mulf %385, %387 : vector<2x128xf32>
        %cst_165 = arith.constant dense<0.000000e+00> : vector<2xf32>
        %389 = vector.multi_reduction <add>, %388, %cst_165 [1] : vector<2x128xf32> to vector<2xf32>
        %390 = vector.shape_cast %389 : vector<2xf32> to vector<2x1xf32>
        %cst_166 = arith.constant 0.000000e+00 : f32
        %391 = vector.broadcast %cst_166 : f32 to vector<2x1xf32>
        %392 = arith.cmpf ogt, %390, %391 : vector<2x1xf32>
        %cst_167 = arith.constant 1.000000e+00 : f32
        %cst_168 = arith.constant -1.000000e+00 : f32
        %393 = vector.broadcast %cst_167 : f32 to vector<2x1xf32>
        %394 = vector.broadcast %cst_168 : f32 to vector<2x1xf32>
        %395 = arith.select %392, %393, %394 : vector<2x1xi1>, vector<2x1xf32>
        %c22_i32 = arith.constant 22 : i32
        %396 = vector.broadcast %c22_i32 : i32 to vector<2x128xi32>
        %397 = arith.cmpi eq, %20, %396 : vector<2x128xi32>
        %398 = vector.shape_cast %395 : vector<2x1xf32> to vector<2x1xf32>
        %399 = vector.broadcast %398 : vector<2x1xf32> to vector<2x128xf32>
        %400 = arith.select %397, %399, %385 : vector<2x128xi1>, vector<2x128xf32>
        %c23 = arith.constant 23 : index
        %c0_169 = arith.constant 0 : index
        %401 = vector.load %arg5[%c23, %c0_169] : memref<64x128xf32, #tpu.memory_space<vmem>>, vector<1x128xf32>
        %402 = vector.broadcast %401 : vector<1x128xf32> to vector<2x128xf32>
        %403 = arith.mulf %400, %402 : vector<2x128xf32>
        %cst_170 = arith.constant dense<0.000000e+00> : vector<2xf32>
        %404 = vector.multi_reduction <add>, %403, %cst_170 [1] : vector<2x128xf32> to vector<2xf32>
        %405 = vector.shape_cast %404 : vector<2xf32> to vector<2x1xf32>
        %cst_171 = arith.constant 0.000000e+00 : f32
        %406 = vector.broadcast %cst_171 : f32 to vector<2x1xf32>
        %407 = arith.cmpf ogt, %405, %406 : vector<2x1xf32>
        %cst_172 = arith.constant 1.000000e+00 : f32
        %cst_173 = arith.constant -1.000000e+00 : f32
        %408 = vector.broadcast %cst_172 : f32 to vector<2x1xf32>
        %409 = vector.broadcast %cst_173 : f32 to vector<2x1xf32>
        %410 = arith.select %407, %408, %409 : vector<2x1xi1>, vector<2x1xf32>
        %c23_i32 = arith.constant 23 : i32
        %411 = vector.broadcast %c23_i32 : i32 to vector<2x128xi32>
        %412 = arith.cmpi eq, %20, %411 : vector<2x128xi32>
        %413 = vector.shape_cast %410 : vector<2x1xf32> to vector<2x1xf32>
        %414 = vector.broadcast %413 : vector<2x1xf32> to vector<2x128xf32>
        %415 = arith.select %412, %414, %400 : vector<2x128xi1>, vector<2x128xf32>
        %c24 = arith.constant 24 : index
        %c0_174 = arith.constant 0 : index
        %416 = vector.load %arg5[%c24, %c0_174] : memref<64x128xf32, #tpu.memory_space<vmem>>, vector<1x128xf32>
        %417 = vector.broadcast %416 : vector<1x128xf32> to vector<2x128xf32>
        %418 = arith.mulf %415, %417 : vector<2x128xf32>
        %cst_175 = arith.constant dense<0.000000e+00> : vector<2xf32>
        %419 = vector.multi_reduction <add>, %418, %cst_175 [1] : vector<2x128xf32> to vector<2xf32>
        %420 = vector.shape_cast %419 : vector<2xf32> to vector<2x1xf32>
        %cst_176 = arith.constant 0.000000e+00 : f32
        %421 = vector.broadcast %cst_176 : f32 to vector<2x1xf32>
        %422 = arith.cmpf ogt, %420, %421 : vector<2x1xf32>
        %cst_177 = arith.constant 1.000000e+00 : f32
        %cst_178 = arith.constant -1.000000e+00 : f32
        %423 = vector.broadcast %cst_177 : f32 to vector<2x1xf32>
        %424 = vector.broadcast %cst_178 : f32 to vector<2x1xf32>
        %425 = arith.select %422, %423, %424 : vector<2x1xi1>, vector<2x1xf32>
        %c24_i32 = arith.constant 24 : i32
        %426 = vector.broadcast %c24_i32 : i32 to vector<2x128xi32>
        %427 = arith.cmpi eq, %20, %426 : vector<2x128xi32>
        %428 = vector.shape_cast %425 : vector<2x1xf32> to vector<2x1xf32>
        %429 = vector.broadcast %428 : vector<2x1xf32> to vector<2x128xf32>
        %430 = arith.select %427, %429, %415 : vector<2x128xi1>, vector<2x128xf32>
        %c25 = arith.constant 25 : index
        %c0_179 = arith.constant 0 : index
        %431 = vector.load %arg5[%c25, %c0_179] : memref<64x128xf32, #tpu.memory_space<vmem>>, vector<1x128xf32>
        %432 = vector.broadcast %431 : vector<1x128xf32> to vector<2x128xf32>
        %433 = arith.mulf %430, %432 : vector<2x128xf32>
        %cst_180 = arith.constant dense<0.000000e+00> : vector<2xf32>
        %434 = vector.multi_reduction <add>, %433, %cst_180 [1] : vector<2x128xf32> to vector<2xf32>
        %435 = vector.shape_cast %434 : vector<2xf32> to vector<2x1xf32>
        %cst_181 = arith.constant 0.000000e+00 : f32
        %436 = vector.broadcast %cst_181 : f32 to vector<2x1xf32>
        %437 = arith.cmpf ogt, %435, %436 : vector<2x1xf32>
        %cst_182 = arith.constant 1.000000e+00 : f32
        %cst_183 = arith.constant -1.000000e+00 : f32
        %438 = vector.broadcast %cst_182 : f32 to vector<2x1xf32>
        %439 = vector.broadcast %cst_183 : f32 to vector<2x1xf32>
        %440 = arith.select %437, %438, %439 : vector<2x1xi1>, vector<2x1xf32>
        %c25_i32 = arith.constant 25 : i32
        %441 = vector.broadcast %c25_i32 : i32 to vector<2x128xi32>
        %442 = arith.cmpi eq, %20, %441 : vector<2x128xi32>
        %443 = vector.shape_cast %440 : vector<2x1xf32> to vector<2x1xf32>
        %444 = vector.broadcast %443 : vector<2x1xf32> to vector<2x128xf32>
        %445 = arith.select %442, %444, %430 : vector<2x128xi1>, vector<2x128xf32>
        %c26 = arith.constant 26 : index
        %c0_184 = arith.constant 0 : index
        %446 = vector.load %arg5[%c26, %c0_184] : memref<64x128xf32, #tpu.memory_space<vmem>>, vector<1x128xf32>
        %447 = vector.broadcast %446 : vector<1x128xf32> to vector<2x128xf32>
        %448 = arith.mulf %445, %447 : vector<2x128xf32>
        %cst_185 = arith.constant dense<0.000000e+00> : vector<2xf32>
        %449 = vector.multi_reduction <add>, %448, %cst_185 [1] : vector<2x128xf32> to vector<2xf32>
        %450 = vector.shape_cast %449 : vector<2xf32> to vector<2x1xf32>
        %cst_186 = arith.constant 0.000000e+00 : f32
        %451 = vector.broadcast %cst_186 : f32 to vector<2x1xf32>
        %452 = arith.cmpf ogt, %450, %451 : vector<2x1xf32>
        %cst_187 = arith.constant 1.000000e+00 : f32
        %cst_188 = arith.constant -1.000000e+00 : f32
        %453 = vector.broadcast %cst_187 : f32 to vector<2x1xf32>
        %454 = vector.broadcast %cst_188 : f32 to vector<2x1xf32>
        %455 = arith.select %452, %453, %454 : vector<2x1xi1>, vector<2x1xf32>
        %c26_i32 = arith.constant 26 : i32
        %456 = vector.broadcast %c26_i32 : i32 to vector<2x128xi32>
        %457 = arith.cmpi eq, %20, %456 : vector<2x128xi32>
        %458 = vector.shape_cast %455 : vector<2x1xf32> to vector<2x1xf32>
        %459 = vector.broadcast %458 : vector<2x1xf32> to vector<2x128xf32>
        %460 = arith.select %457, %459, %445 : vector<2x128xi1>, vector<2x128xf32>
        %c27 = arith.constant 27 : index
        %c0_189 = arith.constant 0 : index
        %461 = vector.load %arg5[%c27, %c0_189] : memref<64x128xf32, #tpu.memory_space<vmem>>, vector<1x128xf32>
        %462 = vector.broadcast %461 : vector<1x128xf32> to vector<2x128xf32>
        %463 = arith.mulf %460, %462 : vector<2x128xf32>
        %cst_190 = arith.constant dense<0.000000e+00> : vector<2xf32>
        %464 = vector.multi_reduction <add>, %463, %cst_190 [1] : vector<2x128xf32> to vector<2xf32>
        %465 = vector.shape_cast %464 : vector<2xf32> to vector<2x1xf32>
        %cst_191 = arith.constant 0.000000e+00 : f32
        %466 = vector.broadcast %cst_191 : f32 to vector<2x1xf32>
        %467 = arith.cmpf ogt, %465, %466 : vector<2x1xf32>
        %cst_192 = arith.constant 1.000000e+00 : f32
        %cst_193 = arith.constant -1.000000e+00 : f32
        %468 = vector.broadcast %cst_192 : f32 to vector<2x1xf32>
        %469 = vector.broadcast %cst_193 : f32 to vector<2x1xf32>
        %470 = arith.select %467, %468, %469 : vector<2x1xi1>, vector<2x1xf32>
        %c27_i32 = arith.constant 27 : i32
        %471 = vector.broadcast %c27_i32 : i32 to vector<2x128xi32>
        %472 = arith.cmpi eq, %20, %471 : vector<2x128xi32>
        %473 = vector.shape_cast %470 : vector<2x1xf32> to vector<2x1xf32>
        %474 = vector.broadcast %473 : vector<2x1xf32> to vector<2x128xf32>
        %475 = arith.select %472, %474, %460 : vector<2x128xi1>, vector<2x128xf32>
        %c28 = arith.constant 28 : index
        %c0_194 = arith.constant 0 : index
        %476 = vector.load %arg5[%c28, %c0_194] : memref<64x128xf32, #tpu.memory_space<vmem>>, vector<1x128xf32>
        %477 = vector.broadcast %476 : vector<1x128xf32> to vector<2x128xf32>
        %478 = arith.mulf %475, %477 : vector<2x128xf32>
        %cst_195 = arith.constant dense<0.000000e+00> : vector<2xf32>
        %479 = vector.multi_reduction <add>, %478, %cst_195 [1] : vector<2x128xf32> to vector<2xf32>
        %480 = vector.shape_cast %479 : vector<2xf32> to vector<2x1xf32>
        %cst_196 = arith.constant 0.000000e+00 : f32
        %481 = vector.broadcast %cst_196 : f32 to vector<2x1xf32>
        %482 = arith.cmpf ogt, %480, %481 : vector<2x1xf32>
        %cst_197 = arith.constant 1.000000e+00 : f32
        %cst_198 = arith.constant -1.000000e+00 : f32
        %483 = vector.broadcast %cst_197 : f32 to vector<2x1xf32>
        %484 = vector.broadcast %cst_198 : f32 to vector<2x1xf32>
        %485 = arith.select %482, %483, %484 : vector<2x1xi1>, vector<2x1xf32>
        %c28_i32 = arith.constant 28 : i32
        %486 = vector.broadcast %c28_i32 : i32 to vector<2x128xi32>
        %487 = arith.cmpi eq, %20, %486 : vector<2x128xi32>
        %488 = vector.shape_cast %485 : vector<2x1xf32> to vector<2x1xf32>
        %489 = vector.broadcast %488 : vector<2x1xf32> to vector<2x128xf32>
        %490 = arith.select %487, %489, %475 : vector<2x128xi1>, vector<2x128xf32>
        %c29 = arith.constant 29 : index
        %c0_199 = arith.constant 0 : index
        %491 = vector.load %arg5[%c29, %c0_199] : memref<64x128xf32, #tpu.memory_space<vmem>>, vector<1x128xf32>
        %492 = vector.broadcast %491 : vector<1x128xf32> to vector<2x128xf32>
        %493 = arith.mulf %490, %492 : vector<2x128xf32>
        %cst_200 = arith.constant dense<0.000000e+00> : vector<2xf32>
        %494 = vector.multi_reduction <add>, %493, %cst_200 [1] : vector<2x128xf32> to vector<2xf32>
        %495 = vector.shape_cast %494 : vector<2xf32> to vector<2x1xf32>
        %cst_201 = arith.constant 0.000000e+00 : f32
        %496 = vector.broadcast %cst_201 : f32 to vector<2x1xf32>
        %497 = arith.cmpf ogt, %495, %496 : vector<2x1xf32>
        %cst_202 = arith.constant 1.000000e+00 : f32
        %cst_203 = arith.constant -1.000000e+00 : f32
        %498 = vector.broadcast %cst_202 : f32 to vector<2x1xf32>
        %499 = vector.broadcast %cst_203 : f32 to vector<2x1xf32>
        %500 = arith.select %497, %498, %499 : vector<2x1xi1>, vector<2x1xf32>
        %c29_i32 = arith.constant 29 : i32
        %501 = vector.broadcast %c29_i32 : i32 to vector<2x128xi32>
        %502 = arith.cmpi eq, %20, %501 : vector<2x128xi32>
        %503 = vector.shape_cast %500 : vector<2x1xf32> to vector<2x1xf32>
        %504 = vector.broadcast %503 : vector<2x1xf32> to vector<2x128xf32>
        %505 = arith.select %502, %504, %490 : vector<2x128xi1>, vector<2x128xf32>
        %c30 = arith.constant 30 : index
        %c0_204 = arith.constant 0 : index
        %506 = vector.load %arg5[%c30, %c0_204] : memref<64x128xf32, #tpu.memory_space<vmem>>, vector<1x128xf32>
        %507 = vector.broadcast %506 : vector<1x128xf32> to vector<2x128xf32>
        %508 = arith.mulf %505, %507 : vector<2x128xf32>
        %cst_205 = arith.constant dense<0.000000e+00> : vector<2xf32>
        %509 = vector.multi_reduction <add>, %508, %cst_205 [1] : vector<2x128xf32> to vector<2xf32>
        %510 = vector.shape_cast %509 : vector<2xf32> to vector<2x1xf32>
        %cst_206 = arith.constant 0.000000e+00 : f32
        %511 = vector.broadcast %cst_206 : f32 to vector<2x1xf32>
        %512 = arith.cmpf ogt, %510, %511 : vector<2x1xf32>
        %cst_207 = arith.constant 1.000000e+00 : f32
        %cst_208 = arith.constant -1.000000e+00 : f32
        %513 = vector.broadcast %cst_207 : f32 to vector<2x1xf32>
        %514 = vector.broadcast %cst_208 : f32 to vector<2x1xf32>
        %515 = arith.select %512, %513, %514 : vector<2x1xi1>, vector<2x1xf32>
        %c30_i32 = arith.constant 30 : i32
        %516 = vector.broadcast %c30_i32 : i32 to vector<2x128xi32>
        %517 = arith.cmpi eq, %20, %516 : vector<2x128xi32>
        %518 = vector.shape_cast %515 : vector<2x1xf32> to vector<2x1xf32>
        %519 = vector.broadcast %518 : vector<2x1xf32> to vector<2x128xf32>
        %520 = arith.select %517, %519, %505 : vector<2x128xi1>, vector<2x128xf32>
        %c31 = arith.constant 31 : index
        %c0_209 = arith.constant 0 : index
        %521 = vector.load %arg5[%c31, %c0_209] : memref<64x128xf32, #tpu.memory_space<vmem>>, vector<1x128xf32>
        %522 = vector.broadcast %521 : vector<1x128xf32> to vector<2x128xf32>
        %523 = arith.mulf %520, %522 : vector<2x128xf32>
        %cst_210 = arith.constant dense<0.000000e+00> : vector<2xf32>
        %524 = vector.multi_reduction <add>, %523, %cst_210 [1] : vector<2x128xf32> to vector<2xf32>
        %525 = vector.shape_cast %524 : vector<2xf32> to vector<2x1xf32>
        %cst_211 = arith.constant 0.000000e+00 : f32
        %526 = vector.broadcast %cst_211 : f32 to vector<2x1xf32>
        %527 = arith.cmpf ogt, %525, %526 : vector<2x1xf32>
        %cst_212 = arith.constant 1.000000e+00 : f32
        %cst_213 = arith.constant -1.000000e+00 : f32
        %528 = vector.broadcast %cst_212 : f32 to vector<2x1xf32>
        %529 = vector.broadcast %cst_213 : f32 to vector<2x1xf32>
        %530 = arith.select %527, %528, %529 : vector<2x1xi1>, vector<2x1xf32>
        %c31_i32 = arith.constant 31 : i32
        %531 = vector.broadcast %c31_i32 : i32 to vector<2x128xi32>
        %532 = arith.cmpi eq, %20, %531 : vector<2x128xi32>
        %533 = vector.shape_cast %530 : vector<2x1xf32> to vector<2x1xf32>
        %534 = vector.broadcast %533 : vector<2x1xf32> to vector<2x128xf32>
        %535 = arith.select %532, %534, %520 : vector<2x128xi1>, vector<2x128xf32>
        %c32 = arith.constant 32 : index
        %c0_214 = arith.constant 0 : index
        %536 = vector.load %arg5[%c32, %c0_214] : memref<64x128xf32, #tpu.memory_space<vmem>>, vector<1x128xf32>
        %537 = vector.broadcast %536 : vector<1x128xf32> to vector<2x128xf32>
        %538 = arith.mulf %535, %537 : vector<2x128xf32>
        %cst_215 = arith.constant dense<0.000000e+00> : vector<2xf32>
        %539 = vector.multi_reduction <add>, %538, %cst_215 [1] : vector<2x128xf32> to vector<2xf32>
        %540 = vector.shape_cast %539 : vector<2xf32> to vector<2x1xf32>
        %cst_216 = arith.constant 0.000000e+00 : f32
        %541 = vector.broadcast %cst_216 : f32 to vector<2x1xf32>
        %542 = arith.cmpf ogt, %540, %541 : vector<2x1xf32>
        %cst_217 = arith.constant 1.000000e+00 : f32
        %cst_218 = arith.constant -1.000000e+00 : f32
        %543 = vector.broadcast %cst_217 : f32 to vector<2x1xf32>
        %544 = vector.broadcast %cst_218 : f32 to vector<2x1xf32>
        %545 = arith.select %542, %543, %544 : vector<2x1xi1>, vector<2x1xf32>
        %c32_i32 = arith.constant 32 : i32
        %546 = vector.broadcast %c32_i32 : i32 to vector<2x128xi32>
        %547 = arith.cmpi eq, %20, %546 : vector<2x128xi32>
        %548 = vector.shape_cast %545 : vector<2x1xf32> to vector<2x1xf32>
        %549 = vector.broadcast %548 : vector<2x1xf32> to vector<2x128xf32>
        %550 = arith.select %547, %549, %535 : vector<2x128xi1>, vector<2x128xf32>
        %c33 = arith.constant 33 : index
        %c0_219 = arith.constant 0 : index
        %551 = vector.load %arg5[%c33, %c0_219] : memref<64x128xf32, #tpu.memory_space<vmem>>, vector<1x128xf32>
        %552 = vector.broadcast %551 : vector<1x128xf32> to vector<2x128xf32>
        %553 = arith.mulf %550, %552 : vector<2x128xf32>
        %cst_220 = arith.constant dense<0.000000e+00> : vector<2xf32>
        %554 = vector.multi_reduction <add>, %553, %cst_220 [1] : vector<2x128xf32> to vector<2xf32>
        %555 = vector.shape_cast %554 : vector<2xf32> to vector<2x1xf32>
        %cst_221 = arith.constant 0.000000e+00 : f32
        %556 = vector.broadcast %cst_221 : f32 to vector<2x1xf32>
        %557 = arith.cmpf ogt, %555, %556 : vector<2x1xf32>
        %cst_222 = arith.constant 1.000000e+00 : f32
        %cst_223 = arith.constant -1.000000e+00 : f32
        %558 = vector.broadcast %cst_222 : f32 to vector<2x1xf32>
        %559 = vector.broadcast %cst_223 : f32 to vector<2x1xf32>
        %560 = arith.select %557, %558, %559 : vector<2x1xi1>, vector<2x1xf32>
        %c33_i32 = arith.constant 33 : i32
        %561 = vector.broadcast %c33_i32 : i32 to vector<2x128xi32>
        %562 = arith.cmpi eq, %20, %561 : vector<2x128xi32>
        %563 = vector.shape_cast %560 : vector<2x1xf32> to vector<2x1xf32>
        %564 = vector.broadcast %563 : vector<2x1xf32> to vector<2x128xf32>
        %565 = arith.select %562, %564, %550 : vector<2x128xi1>, vector<2x128xf32>
        %c34 = arith.constant 34 : index
        %c0_224 = arith.constant 0 : index
        %566 = vector.load %arg5[%c34, %c0_224] : memref<64x128xf32, #tpu.memory_space<vmem>>, vector<1x128xf32>
        %567 = vector.broadcast %566 : vector<1x128xf32> to vector<2x128xf32>
        %568 = arith.mulf %565, %567 : vector<2x128xf32>
        %cst_225 = arith.constant dense<0.000000e+00> : vector<2xf32>
        %569 = vector.multi_reduction <add>, %568, %cst_225 [1] : vector<2x128xf32> to vector<2xf32>
        %570 = vector.shape_cast %569 : vector<2xf32> to vector<2x1xf32>
        %cst_226 = arith.constant 0.000000e+00 : f32
        %571 = vector.broadcast %cst_226 : f32 to vector<2x1xf32>
        %572 = arith.cmpf ogt, %570, %571 : vector<2x1xf32>
        %cst_227 = arith.constant 1.000000e+00 : f32
        %cst_228 = arith.constant -1.000000e+00 : f32
        %573 = vector.broadcast %cst_227 : f32 to vector<2x1xf32>
        %574 = vector.broadcast %cst_228 : f32 to vector<2x1xf32>
        %575 = arith.select %572, %573, %574 : vector<2x1xi1>, vector<2x1xf32>
        %c34_i32 = arith.constant 34 : i32
        %576 = vector.broadcast %c34_i32 : i32 to vector<2x128xi32>
        %577 = arith.cmpi eq, %20, %576 : vector<2x128xi32>
        %578 = vector.shape_cast %575 : vector<2x1xf32> to vector<2x1xf32>
        %579 = vector.broadcast %578 : vector<2x1xf32> to vector<2x128xf32>
        %580 = arith.select %577, %579, %565 : vector<2x128xi1>, vector<2x128xf32>
        %c35 = arith.constant 35 : index
        %c0_229 = arith.constant 0 : index
        %581 = vector.load %arg5[%c35, %c0_229] : memref<64x128xf32, #tpu.memory_space<vmem>>, vector<1x128xf32>
        %582 = vector.broadcast %581 : vector<1x128xf32> to vector<2x128xf32>
        %583 = arith.mulf %580, %582 : vector<2x128xf32>
        %cst_230 = arith.constant dense<0.000000e+00> : vector<2xf32>
        %584 = vector.multi_reduction <add>, %583, %cst_230 [1] : vector<2x128xf32> to vector<2xf32>
        %585 = vector.shape_cast %584 : vector<2xf32> to vector<2x1xf32>
        %cst_231 = arith.constant 0.000000e+00 : f32
        %586 = vector.broadcast %cst_231 : f32 to vector<2x1xf32>
        %587 = arith.cmpf ogt, %585, %586 : vector<2x1xf32>
        %cst_232 = arith.constant 1.000000e+00 : f32
        %cst_233 = arith.constant -1.000000e+00 : f32
        %588 = vector.broadcast %cst_232 : f32 to vector<2x1xf32>
        %589 = vector.broadcast %cst_233 : f32 to vector<2x1xf32>
        %590 = arith.select %587, %588, %589 : vector<2x1xi1>, vector<2x1xf32>
        %c35_i32 = arith.constant 35 : i32
        %591 = vector.broadcast %c35_i32 : i32 to vector<2x128xi32>
        %592 = arith.cmpi eq, %20, %591 : vector<2x128xi32>
        %593 = vector.shape_cast %590 : vector<2x1xf32> to vector<2x1xf32>
        %594 = vector.broadcast %593 : vector<2x1xf32> to vector<2x128xf32>
        %595 = arith.select %592, %594, %580 : vector<2x128xi1>, vector<2x128xf32>
        %c36 = arith.constant 36 : index
        %c0_234 = arith.constant 0 : index
        %596 = vector.load %arg5[%c36, %c0_234] : memref<64x128xf32, #tpu.memory_space<vmem>>, vector<1x128xf32>
        %597 = vector.broadcast %596 : vector<1x128xf32> to vector<2x128xf32>
        %598 = arith.mulf %595, %597 : vector<2x128xf32>
        %cst_235 = arith.constant dense<0.000000e+00> : vector<2xf32>
        %599 = vector.multi_reduction <add>, %598, %cst_235 [1] : vector<2x128xf32> to vector<2xf32>
        %600 = vector.shape_cast %599 : vector<2xf32> to vector<2x1xf32>
        %cst_236 = arith.constant 0.000000e+00 : f32
        %601 = vector.broadcast %cst_236 : f32 to vector<2x1xf32>
        %602 = arith.cmpf ogt, %600, %601 : vector<2x1xf32>
        %cst_237 = arith.constant 1.000000e+00 : f32
        %cst_238 = arith.constant -1.000000e+00 : f32
        %603 = vector.broadcast %cst_237 : f32 to vector<2x1xf32>
        %604 = vector.broadcast %cst_238 : f32 to vector<2x1xf32>
        %605 = arith.select %602, %603, %604 : vector<2x1xi1>, vector<2x1xf32>
        %c36_i32 = arith.constant 36 : i32
        %606 = vector.broadcast %c36_i32 : i32 to vector<2x128xi32>
        %607 = arith.cmpi eq, %20, %606 : vector<2x128xi32>
        %608 = vector.shape_cast %605 : vector<2x1xf32> to vector<2x1xf32>
        %609 = vector.broadcast %608 : vector<2x1xf32> to vector<2x128xf32>
        %610 = arith.select %607, %609, %595 : vector<2x128xi1>, vector<2x128xf32>
        %c37 = arith.constant 37 : index
        %c0_239 = arith.constant 0 : index
        %611 = vector.load %arg5[%c37, %c0_239] : memref<64x128xf32, #tpu.memory_space<vmem>>, vector<1x128xf32>
        %612 = vector.broadcast %611 : vector<1x128xf32> to vector<2x128xf32>
        %613 = arith.mulf %610, %612 : vector<2x128xf32>
        %cst_240 = arith.constant dense<0.000000e+00> : vector<2xf32>
        %614 = vector.multi_reduction <add>, %613, %cst_240 [1] : vector<2x128xf32> to vector<2xf32>
        %615 = vector.shape_cast %614 : vector<2xf32> to vector<2x1xf32>
        %cst_241 = arith.constant 0.000000e+00 : f32
        %616 = vector.broadcast %cst_241 : f32 to vector<2x1xf32>
        %617 = arith.cmpf ogt, %615, %616 : vector<2x1xf32>
        %cst_242 = arith.constant 1.000000e+00 : f32
        %cst_243 = arith.constant -1.000000e+00 : f32
        %618 = vector.broadcast %cst_242 : f32 to vector<2x1xf32>
        %619 = vector.broadcast %cst_243 : f32 to vector<2x1xf32>
        %620 = arith.select %617, %618, %619 : vector<2x1xi1>, vector<2x1xf32>
        %c37_i32 = arith.constant 37 : i32
        %621 = vector.broadcast %c37_i32 : i32 to vector<2x128xi32>
        %622 = arith.cmpi eq, %20, %621 : vector<2x128xi32>
        %623 = vector.shape_cast %620 : vector<2x1xf32> to vector<2x1xf32>
        %624 = vector.broadcast %623 : vector<2x1xf32> to vector<2x128xf32>
        %625 = arith.select %622, %624, %610 : vector<2x128xi1>, vector<2x128xf32>
        %c38 = arith.constant 38 : index
        %c0_244 = arith.constant 0 : index
        %626 = vector.load %arg5[%c38, %c0_244] : memref<64x128xf32, #tpu.memory_space<vmem>>, vector<1x128xf32>
        %627 = vector.broadcast %626 : vector<1x128xf32> to vector<2x128xf32>
        %628 = arith.mulf %625, %627 : vector<2x128xf32>
        %cst_245 = arith.constant dense<0.000000e+00> : vector<2xf32>
        %629 = vector.multi_reduction <add>, %628, %cst_245 [1] : vector<2x128xf32> to vector<2xf32>
        %630 = vector.shape_cast %629 : vector<2xf32> to vector<2x1xf32>
        %cst_246 = arith.constant 0.000000e+00 : f32
        %631 = vector.broadcast %cst_246 : f32 to vector<2x1xf32>
        %632 = arith.cmpf ogt, %630, %631 : vector<2x1xf32>
        %cst_247 = arith.constant 1.000000e+00 : f32
        %cst_248 = arith.constant -1.000000e+00 : f32
        %633 = vector.broadcast %cst_247 : f32 to vector<2x1xf32>
        %634 = vector.broadcast %cst_248 : f32 to vector<2x1xf32>
        %635 = arith.select %632, %633, %634 : vector<2x1xi1>, vector<2x1xf32>
        %c38_i32 = arith.constant 38 : i32
        %636 = vector.broadcast %c38_i32 : i32 to vector<2x128xi32>
        %637 = arith.cmpi eq, %20, %636 : vector<2x128xi32>
        %638 = vector.shape_cast %635 : vector<2x1xf32> to vector<2x1xf32>
        %639 = vector.broadcast %638 : vector<2x1xf32> to vector<2x128xf32>
        %640 = arith.select %637, %639, %625 : vector<2x128xi1>, vector<2x128xf32>
        %c39 = arith.constant 39 : index
        %c0_249 = arith.constant 0 : index
        %641 = vector.load %arg5[%c39, %c0_249] : memref<64x128xf32, #tpu.memory_space<vmem>>, vector<1x128xf32>
        %642 = vector.broadcast %641 : vector<1x128xf32> to vector<2x128xf32>
        %643 = arith.mulf %640, %642 : vector<2x128xf32>
        %cst_250 = arith.constant dense<0.000000e+00> : vector<2xf32>
        %644 = vector.multi_reduction <add>, %643, %cst_250 [1] : vector<2x128xf32> to vector<2xf32>
        %645 = vector.shape_cast %644 : vector<2xf32> to vector<2x1xf32>
        %cst_251 = arith.constant 0.000000e+00 : f32
        %646 = vector.broadcast %cst_251 : f32 to vector<2x1xf32>
        %647 = arith.cmpf ogt, %645, %646 : vector<2x1xf32>
        %cst_252 = arith.constant 1.000000e+00 : f32
        %cst_253 = arith.constant -1.000000e+00 : f32
        %648 = vector.broadcast %cst_252 : f32 to vector<2x1xf32>
        %649 = vector.broadcast %cst_253 : f32 to vector<2x1xf32>
        %650 = arith.select %647, %648, %649 : vector<2x1xi1>, vector<2x1xf32>
        %c39_i32 = arith.constant 39 : i32
        %651 = vector.broadcast %c39_i32 : i32 to vector<2x128xi32>
        %652 = arith.cmpi eq, %20, %651 : vector<2x128xi32>
        %653 = vector.shape_cast %650 : vector<2x1xf32> to vector<2x1xf32>
        %654 = vector.broadcast %653 : vector<2x1xf32> to vector<2x128xf32>
        %655 = arith.select %652, %654, %640 : vector<2x128xi1>, vector<2x128xf32>
        %c40 = arith.constant 40 : index
        %c0_254 = arith.constant 0 : index
        %656 = vector.load %arg5[%c40, %c0_254] : memref<64x128xf32, #tpu.memory_space<vmem>>, vector<1x128xf32>
        %657 = vector.broadcast %656 : vector<1x128xf32> to vector<2x128xf32>
        %658 = arith.mulf %655, %657 : vector<2x128xf32>
        %cst_255 = arith.constant dense<0.000000e+00> : vector<2xf32>
        %659 = vector.multi_reduction <add>, %658, %cst_255 [1] : vector<2x128xf32> to vector<2xf32>
        %660 = vector.shape_cast %659 : vector<2xf32> to vector<2x1xf32>
        %cst_256 = arith.constant 0.000000e+00 : f32
        %661 = vector.broadcast %cst_256 : f32 to vector<2x1xf32>
        %662 = arith.cmpf ogt, %660, %661 : vector<2x1xf32>
        %cst_257 = arith.constant 1.000000e+00 : f32
        %cst_258 = arith.constant -1.000000e+00 : f32
        %663 = vector.broadcast %cst_257 : f32 to vector<2x1xf32>
        %664 = vector.broadcast %cst_258 : f32 to vector<2x1xf32>
        %665 = arith.select %662, %663, %664 : vector<2x1xi1>, vector<2x1xf32>
        %c40_i32 = arith.constant 40 : i32
        %666 = vector.broadcast %c40_i32 : i32 to vector<2x128xi32>
        %667 = arith.cmpi eq, %20, %666 : vector<2x128xi32>
        %668 = vector.shape_cast %665 : vector<2x1xf32> to vector<2x1xf32>
        %669 = vector.broadcast %668 : vector<2x1xf32> to vector<2x128xf32>
        %670 = arith.select %667, %669, %655 : vector<2x128xi1>, vector<2x128xf32>
        %c41 = arith.constant 41 : index
        %c0_259 = arith.constant 0 : index
        %671 = vector.load %arg5[%c41, %c0_259] : memref<64x128xf32, #tpu.memory_space<vmem>>, vector<1x128xf32>
        %672 = vector.broadcast %671 : vector<1x128xf32> to vector<2x128xf32>
        %673 = arith.mulf %670, %672 : vector<2x128xf32>
        %cst_260 = arith.constant dense<0.000000e+00> : vector<2xf32>
        %674 = vector.multi_reduction <add>, %673, %cst_260 [1] : vector<2x128xf32> to vector<2xf32>
        %675 = vector.shape_cast %674 : vector<2xf32> to vector<2x1xf32>
        %cst_261 = arith.constant 0.000000e+00 : f32
        %676 = vector.broadcast %cst_261 : f32 to vector<2x1xf32>
        %677 = arith.cmpf ogt, %675, %676 : vector<2x1xf32>
        %cst_262 = arith.constant 1.000000e+00 : f32
        %cst_263 = arith.constant -1.000000e+00 : f32
        %678 = vector.broadcast %cst_262 : f32 to vector<2x1xf32>
        %679 = vector.broadcast %cst_263 : f32 to vector<2x1xf32>
        %680 = arith.select %677, %678, %679 : vector<2x1xi1>, vector<2x1xf32>
        %c41_i32 = arith.constant 41 : i32
        %681 = vector.broadcast %c41_i32 : i32 to vector<2x128xi32>
        %682 = arith.cmpi eq, %20, %681 : vector<2x128xi32>
        %683 = vector.shape_cast %680 : vector<2x1xf32> to vector<2x1xf32>
        %684 = vector.broadcast %683 : vector<2x1xf32> to vector<2x128xf32>
        %685 = arith.select %682, %684, %670 : vector<2x128xi1>, vector<2x128xf32>
        %c42 = arith.constant 42 : index
        %c0_264 = arith.constant 0 : index
        %686 = vector.load %arg5[%c42, %c0_264] : memref<64x128xf32, #tpu.memory_space<vmem>>, vector<1x128xf32>
        %687 = vector.broadcast %686 : vector<1x128xf32> to vector<2x128xf32>
        %688 = arith.mulf %685, %687 : vector<2x128xf32>
        %cst_265 = arith.constant dense<0.000000e+00> : vector<2xf32>
        %689 = vector.multi_reduction <add>, %688, %cst_265 [1] : vector<2x128xf32> to vector<2xf32>
        %690 = vector.shape_cast %689 : vector<2xf32> to vector<2x1xf32>
        %cst_266 = arith.constant 0.000000e+00 : f32
        %691 = vector.broadcast %cst_266 : f32 to vector<2x1xf32>
        %692 = arith.cmpf ogt, %690, %691 : vector<2x1xf32>
        %cst_267 = arith.constant 1.000000e+00 : f32
        %cst_268 = arith.constant -1.000000e+00 : f32
        %693 = vector.broadcast %cst_267 : f32 to vector<2x1xf32>
        %694 = vector.broadcast %cst_268 : f32 to vector<2x1xf32>
        %695 = arith.select %692, %693, %694 : vector<2x1xi1>, vector<2x1xf32>
        %c42_i32 = arith.constant 42 : i32
        %696 = vector.broadcast %c42_i32 : i32 to vector<2x128xi32>
        %697 = arith.cmpi eq, %20, %696 : vector<2x128xi32>
        %698 = vector.shape_cast %695 : vector<2x1xf32> to vector<2x1xf32>
        %699 = vector.broadcast %698 : vector<2x1xf32> to vector<2x128xf32>
        %700 = arith.select %697, %699, %685 : vector<2x128xi1>, vector<2x128xf32>
        %c43 = arith.constant 43 : index
        %c0_269 = arith.constant 0 : index
        %701 = vector.load %arg5[%c43, %c0_269] : memref<64x128xf32, #tpu.memory_space<vmem>>, vector<1x128xf32>
        %702 = vector.broadcast %701 : vector<1x128xf32> to vector<2x128xf32>
        %703 = arith.mulf %700, %702 : vector<2x128xf32>
        %cst_270 = arith.constant dense<0.000000e+00> : vector<2xf32>
        %704 = vector.multi_reduction <add>, %703, %cst_270 [1] : vector<2x128xf32> to vector<2xf32>
        %705 = vector.shape_cast %704 : vector<2xf32> to vector<2x1xf32>
        %cst_271 = arith.constant 0.000000e+00 : f32
        %706 = vector.broadcast %cst_271 : f32 to vector<2x1xf32>
        %707 = arith.cmpf ogt, %705, %706 : vector<2x1xf32>
        %cst_272 = arith.constant 1.000000e+00 : f32
        %cst_273 = arith.constant -1.000000e+00 : f32
        %708 = vector.broadcast %cst_272 : f32 to vector<2x1xf32>
        %709 = vector.broadcast %cst_273 : f32 to vector<2x1xf32>
        %710 = arith.select %707, %708, %709 : vector<2x1xi1>, vector<2x1xf32>
        %c43_i32 = arith.constant 43 : i32
        %711 = vector.broadcast %c43_i32 : i32 to vector<2x128xi32>
        %712 = arith.cmpi eq, %20, %711 : vector<2x128xi32>
        %713 = vector.shape_cast %710 : vector<2x1xf32> to vector<2x1xf32>
        %714 = vector.broadcast %713 : vector<2x1xf32> to vector<2x128xf32>
        %715 = arith.select %712, %714, %700 : vector<2x128xi1>, vector<2x128xf32>
        %c44 = arith.constant 44 : index
        %c0_274 = arith.constant 0 : index
        %716 = vector.load %arg5[%c44, %c0_274] : memref<64x128xf32, #tpu.memory_space<vmem>>, vector<1x128xf32>
        %717 = vector.broadcast %716 : vector<1x128xf32> to vector<2x128xf32>
        %718 = arith.mulf %715, %717 : vector<2x128xf32>
        %cst_275 = arith.constant dense<0.000000e+00> : vector<2xf32>
        %719 = vector.multi_reduction <add>, %718, %cst_275 [1] : vector<2x128xf32> to vector<2xf32>
        %720 = vector.shape_cast %719 : vector<2xf32> to vector<2x1xf32>
        %cst_276 = arith.constant 0.000000e+00 : f32
        %721 = vector.broadcast %cst_276 : f32 to vector<2x1xf32>
        %722 = arith.cmpf ogt, %720, %721 : vector<2x1xf32>
        %cst_277 = arith.constant 1.000000e+00 : f32
        %cst_278 = arith.constant -1.000000e+00 : f32
        %723 = vector.broadcast %cst_277 : f32 to vector<2x1xf32>
        %724 = vector.broadcast %cst_278 : f32 to vector<2x1xf32>
        %725 = arith.select %722, %723, %724 : vector<2x1xi1>, vector<2x1xf32>
        %c44_i32 = arith.constant 44 : i32
        %726 = vector.broadcast %c44_i32 : i32 to vector<2x128xi32>
        %727 = arith.cmpi eq, %20, %726 : vector<2x128xi32>
        %728 = vector.shape_cast %725 : vector<2x1xf32> to vector<2x1xf32>
        %729 = vector.broadcast %728 : vector<2x1xf32> to vector<2x128xf32>
        %730 = arith.select %727, %729, %715 : vector<2x128xi1>, vector<2x128xf32>
        %c45 = arith.constant 45 : index
        %c0_279 = arith.constant 0 : index
        %731 = vector.load %arg5[%c45, %c0_279] : memref<64x128xf32, #tpu.memory_space<vmem>>, vector<1x128xf32>
        %732 = vector.broadcast %731 : vector<1x128xf32> to vector<2x128xf32>
        %733 = arith.mulf %730, %732 : vector<2x128xf32>
        %cst_280 = arith.constant dense<0.000000e+00> : vector<2xf32>
        %734 = vector.multi_reduction <add>, %733, %cst_280 [1] : vector<2x128xf32> to vector<2xf32>
        %735 = vector.shape_cast %734 : vector<2xf32> to vector<2x1xf32>
        %cst_281 = arith.constant 0.000000e+00 : f32
        %736 = vector.broadcast %cst_281 : f32 to vector<2x1xf32>
        %737 = arith.cmpf ogt, %735, %736 : vector<2x1xf32>
        %cst_282 = arith.constant 1.000000e+00 : f32
        %cst_283 = arith.constant -1.000000e+00 : f32
        %738 = vector.broadcast %cst_282 : f32 to vector<2x1xf32>
        %739 = vector.broadcast %cst_283 : f32 to vector<2x1xf32>
        %740 = arith.select %737, %738, %739 : vector<2x1xi1>, vector<2x1xf32>
        %c45_i32 = arith.constant 45 : i32
        %741 = vector.broadcast %c45_i32 : i32 to vector<2x128xi32>
        %742 = arith.cmpi eq, %20, %741 : vector<2x128xi32>
        %743 = vector.shape_cast %740 : vector<2x1xf32> to vector<2x1xf32>
        %744 = vector.broadcast %743 : vector<2x1xf32> to vector<2x128xf32>
        %745 = arith.select %742, %744, %730 : vector<2x128xi1>, vector<2x128xf32>
        %c46 = arith.constant 46 : index
        %c0_284 = arith.constant 0 : index
        %746 = vector.load %arg5[%c46, %c0_284] : memref<64x128xf32, #tpu.memory_space<vmem>>, vector<1x128xf32>
        %747 = vector.broadcast %746 : vector<1x128xf32> to vector<2x128xf32>
        %748 = arith.mulf %745, %747 : vector<2x128xf32>
        %cst_285 = arith.constant dense<0.000000e+00> : vector<2xf32>
        %749 = vector.multi_reduction <add>, %748, %cst_285 [1] : vector<2x128xf32> to vector<2xf32>
        %750 = vector.shape_cast %749 : vector<2xf32> to vector<2x1xf32>
        %cst_286 = arith.constant 0.000000e+00 : f32
        %751 = vector.broadcast %cst_286 : f32 to vector<2x1xf32>
        %752 = arith.cmpf ogt, %750, %751 : vector<2x1xf32>
        %cst_287 = arith.constant 1.000000e+00 : f32
        %cst_288 = arith.constant -1.000000e+00 : f32
        %753 = vector.broadcast %cst_287 : f32 to vector<2x1xf32>
        %754 = vector.broadcast %cst_288 : f32 to vector<2x1xf32>
        %755 = arith.select %752, %753, %754 : vector<2x1xi1>, vector<2x1xf32>
        %c46_i32 = arith.constant 46 : i32
        %756 = vector.broadcast %c46_i32 : i32 to vector<2x128xi32>
        %757 = arith.cmpi eq, %20, %756 : vector<2x128xi32>
        %758 = vector.shape_cast %755 : vector<2x1xf32> to vector<2x1xf32>
        %759 = vector.broadcast %758 : vector<2x1xf32> to vector<2x128xf32>
        %760 = arith.select %757, %759, %745 : vector<2x128xi1>, vector<2x128xf32>
        %c47 = arith.constant 47 : index
        %c0_289 = arith.constant 0 : index
        %761 = vector.load %arg5[%c47, %c0_289] : memref<64x128xf32, #tpu.memory_space<vmem>>, vector<1x128xf32>
        %762 = vector.broadcast %761 : vector<1x128xf32> to vector<2x128xf32>
        %763 = arith.mulf %760, %762 : vector<2x128xf32>
        %cst_290 = arith.constant dense<0.000000e+00> : vector<2xf32>
        %764 = vector.multi_reduction <add>, %763, %cst_290 [1] : vector<2x128xf32> to vector<2xf32>
        %765 = vector.shape_cast %764 : vector<2xf32> to vector<2x1xf32>
        %cst_291 = arith.constant 0.000000e+00 : f32
        %766 = vector.broadcast %cst_291 : f32 to vector<2x1xf32>
        %767 = arith.cmpf ogt, %765, %766 : vector<2x1xf32>
        %cst_292 = arith.constant 1.000000e+00 : f32
        %cst_293 = arith.constant -1.000000e+00 : f32
        %768 = vector.broadcast %cst_292 : f32 to vector<2x1xf32>
        %769 = vector.broadcast %cst_293 : f32 to vector<2x1xf32>
        %770 = arith.select %767, %768, %769 : vector<2x1xi1>, vector<2x1xf32>
        %c47_i32 = arith.constant 47 : i32
        %771 = vector.broadcast %c47_i32 : i32 to vector<2x128xi32>
        %772 = arith.cmpi eq, %20, %771 : vector<2x128xi32>
        %773 = vector.shape_cast %770 : vector<2x1xf32> to vector<2x1xf32>
        %774 = vector.broadcast %773 : vector<2x1xf32> to vector<2x128xf32>
        %775 = arith.select %772, %774, %760 : vector<2x128xi1>, vector<2x128xf32>
        %c48 = arith.constant 48 : index
        %c0_294 = arith.constant 0 : index
        %776 = vector.load %arg5[%c48, %c0_294] : memref<64x128xf32, #tpu.memory_space<vmem>>, vector<1x128xf32>
        %777 = vector.broadcast %776 : vector<1x128xf32> to vector<2x128xf32>
        %778 = arith.mulf %775, %777 : vector<2x128xf32>
        %cst_295 = arith.constant dense<0.000000e+00> : vector<2xf32>
        %779 = vector.multi_reduction <add>, %778, %cst_295 [1] : vector<2x128xf32> to vector<2xf32>
        %780 = vector.shape_cast %779 : vector<2xf32> to vector<2x1xf32>
        %cst_296 = arith.constant 0.000000e+00 : f32
        %781 = vector.broadcast %cst_296 : f32 to vector<2x1xf32>
        %782 = arith.cmpf ogt, %780, %781 : vector<2x1xf32>
        %cst_297 = arith.constant 1.000000e+00 : f32
        %cst_298 = arith.constant -1.000000e+00 : f32
        %783 = vector.broadcast %cst_297 : f32 to vector<2x1xf32>
        %784 = vector.broadcast %cst_298 : f32 to vector<2x1xf32>
        %785 = arith.select %782, %783, %784 : vector<2x1xi1>, vector<2x1xf32>
        %c48_i32 = arith.constant 48 : i32
        %786 = vector.broadcast %c48_i32 : i32 to vector<2x128xi32>
        %787 = arith.cmpi eq, %20, %786 : vector<2x128xi32>
        %788 = vector.shape_cast %785 : vector<2x1xf32> to vector<2x1xf32>
        %789 = vector.broadcast %788 : vector<2x1xf32> to vector<2x128xf32>
        %790 = arith.select %787, %789, %775 : vector<2x128xi1>, vector<2x128xf32>
        %c49 = arith.constant 49 : index
        %c0_299 = arith.constant 0 : index
        %791 = vector.load %arg5[%c49, %c0_299] : memref<64x128xf32, #tpu.memory_space<vmem>>, vector<1x128xf32>
        %792 = vector.broadcast %791 : vector<1x128xf32> to vector<2x128xf32>
        %793 = arith.mulf %790, %792 : vector<2x128xf32>
        %cst_300 = arith.constant dense<0.000000e+00> : vector<2xf32>
        %794 = vector.multi_reduction <add>, %793, %cst_300 [1] : vector<2x128xf32> to vector<2xf32>
        %795 = vector.shape_cast %794 : vector<2xf32> to vector<2x1xf32>
        %cst_301 = arith.constant 0.000000e+00 : f32
        %796 = vector.broadcast %cst_301 : f32 to vector<2x1xf32>
        %797 = arith.cmpf ogt, %795, %796 : vector<2x1xf32>
        %cst_302 = arith.constant 1.000000e+00 : f32
        %cst_303 = arith.constant -1.000000e+00 : f32
        %798 = vector.broadcast %cst_302 : f32 to vector<2x1xf32>
        %799 = vector.broadcast %cst_303 : f32 to vector<2x1xf32>
        %800 = arith.select %797, %798, %799 : vector<2x1xi1>, vector<2x1xf32>
        %c49_i32 = arith.constant 49 : i32
        %801 = vector.broadcast %c49_i32 : i32 to vector<2x128xi32>
        %802 = arith.cmpi eq, %20, %801 : vector<2x128xi32>
        %803 = vector.shape_cast %800 : vector<2x1xf32> to vector<2x1xf32>
        %804 = vector.broadcast %803 : vector<2x1xf32> to vector<2x128xf32>
        %805 = arith.select %802, %804, %790 : vector<2x128xi1>, vector<2x128xf32>
        %c50 = arith.constant 50 : index
        %c0_304 = arith.constant 0 : index
        %806 = vector.load %arg5[%c50, %c0_304] : memref<64x128xf32, #tpu.memory_space<vmem>>, vector<1x128xf32>
        %807 = vector.broadcast %806 : vector<1x128xf32> to vector<2x128xf32>
        %808 = arith.mulf %805, %807 : vector<2x128xf32>
        %cst_305 = arith.constant dense<0.000000e+00> : vector<2xf32>
        %809 = vector.multi_reduction <add>, %808, %cst_305 [1] : vector<2x128xf32> to vector<2xf32>
        %810 = vector.shape_cast %809 : vector<2xf32> to vector<2x1xf32>
        %cst_306 = arith.constant 0.000000e+00 : f32
        %811 = vector.broadcast %cst_306 : f32 to vector<2x1xf32>
        %812 = arith.cmpf ogt, %810, %811 : vector<2x1xf32>
        %cst_307 = arith.constant 1.000000e+00 : f32
        %cst_308 = arith.constant -1.000000e+00 : f32
        %813 = vector.broadcast %cst_307 : f32 to vector<2x1xf32>
        %814 = vector.broadcast %cst_308 : f32 to vector<2x1xf32>
        %815 = arith.select %812, %813, %814 : vector<2x1xi1>, vector<2x1xf32>
        %c50_i32 = arith.constant 50 : i32
        %816 = vector.broadcast %c50_i32 : i32 to vector<2x128xi32>
        %817 = arith.cmpi eq, %20, %816 : vector<2x128xi32>
        %818 = vector.shape_cast %815 : vector<2x1xf32> to vector<2x1xf32>
        %819 = vector.broadcast %818 : vector<2x1xf32> to vector<2x128xf32>
        %820 = arith.select %817, %819, %805 : vector<2x128xi1>, vector<2x128xf32>
        %c51 = arith.constant 51 : index
        %c0_309 = arith.constant 0 : index
        %821 = vector.load %arg5[%c51, %c0_309] : memref<64x128xf32, #tpu.memory_space<vmem>>, vector<1x128xf32>
        %822 = vector.broadcast %821 : vector<1x128xf32> to vector<2x128xf32>
        %823 = arith.mulf %820, %822 : vector<2x128xf32>
        %cst_310 = arith.constant dense<0.000000e+00> : vector<2xf32>
        %824 = vector.multi_reduction <add>, %823, %cst_310 [1] : vector<2x128xf32> to vector<2xf32>
        %825 = vector.shape_cast %824 : vector<2xf32> to vector<2x1xf32>
        %cst_311 = arith.constant 0.000000e+00 : f32
        %826 = vector.broadcast %cst_311 : f32 to vector<2x1xf32>
        %827 = arith.cmpf ogt, %825, %826 : vector<2x1xf32>
        %cst_312 = arith.constant 1.000000e+00 : f32
        %cst_313 = arith.constant -1.000000e+00 : f32
        %828 = vector.broadcast %cst_312 : f32 to vector<2x1xf32>
        %829 = vector.broadcast %cst_313 : f32 to vector<2x1xf32>
        %830 = arith.select %827, %828, %829 : vector<2x1xi1>, vector<2x1xf32>
        %c51_i32 = arith.constant 51 : i32
        %831 = vector.broadcast %c51_i32 : i32 to vector<2x128xi32>
        %832 = arith.cmpi eq, %20, %831 : vector<2x128xi32>
        %833 = vector.shape_cast %830 : vector<2x1xf32> to vector<2x1xf32>
        %834 = vector.broadcast %833 : vector<2x1xf32> to vector<2x128xf32>
        %835 = arith.select %832, %834, %820 : vector<2x128xi1>, vector<2x128xf32>
        %c52 = arith.constant 52 : index
        %c0_314 = arith.constant 0 : index
        %836 = vector.load %arg5[%c52, %c0_314] : memref<64x128xf32, #tpu.memory_space<vmem>>, vector<1x128xf32>
        %837 = vector.broadcast %836 : vector<1x128xf32> to vector<2x128xf32>
        %838 = arith.mulf %835, %837 : vector<2x128xf32>
        %cst_315 = arith.constant dense<0.000000e+00> : vector<2xf32>
        %839 = vector.multi_reduction <add>, %838, %cst_315 [1] : vector<2x128xf32> to vector<2xf32>
        %840 = vector.shape_cast %839 : vector<2xf32> to vector<2x1xf32>
        %cst_316 = arith.constant 0.000000e+00 : f32
        %841 = vector.broadcast %cst_316 : f32 to vector<2x1xf32>
        %842 = arith.cmpf ogt, %840, %841 : vector<2x1xf32>
        %cst_317 = arith.constant 1.000000e+00 : f32
        %cst_318 = arith.constant -1.000000e+00 : f32
        %843 = vector.broadcast %cst_317 : f32 to vector<2x1xf32>
        %844 = vector.broadcast %cst_318 : f32 to vector<2x1xf32>
        %845 = arith.select %842, %843, %844 : vector<2x1xi1>, vector<2x1xf32>
        %c52_i32 = arith.constant 52 : i32
        %846 = vector.broadcast %c52_i32 : i32 to vector<2x128xi32>
        %847 = arith.cmpi eq, %20, %846 : vector<2x128xi32>
        %848 = vector.shape_cast %845 : vector<2x1xf32> to vector<2x1xf32>
        %849 = vector.broadcast %848 : vector<2x1xf32> to vector<2x128xf32>
        %850 = arith.select %847, %849, %835 : vector<2x128xi1>, vector<2x128xf32>
        %c53 = arith.constant 53 : index
        %c0_319 = arith.constant 0 : index
        %851 = vector.load %arg5[%c53, %c0_319] : memref<64x128xf32, #tpu.memory_space<vmem>>, vector<1x128xf32>
        %852 = vector.broadcast %851 : vector<1x128xf32> to vector<2x128xf32>
        %853 = arith.mulf %850, %852 : vector<2x128xf32>
        %cst_320 = arith.constant dense<0.000000e+00> : vector<2xf32>
        %854 = vector.multi_reduction <add>, %853, %cst_320 [1] : vector<2x128xf32> to vector<2xf32>
        %855 = vector.shape_cast %854 : vector<2xf32> to vector<2x1xf32>
        %cst_321 = arith.constant 0.000000e+00 : f32
        %856 = vector.broadcast %cst_321 : f32 to vector<2x1xf32>
        %857 = arith.cmpf ogt, %855, %856 : vector<2x1xf32>
        %cst_322 = arith.constant 1.000000e+00 : f32
        %cst_323 = arith.constant -1.000000e+00 : f32
        %858 = vector.broadcast %cst_322 : f32 to vector<2x1xf32>
        %859 = vector.broadcast %cst_323 : f32 to vector<2x1xf32>
        %860 = arith.select %857, %858, %859 : vector<2x1xi1>, vector<2x1xf32>
        %c53_i32 = arith.constant 53 : i32
        %861 = vector.broadcast %c53_i32 : i32 to vector<2x128xi32>
        %862 = arith.cmpi eq, %20, %861 : vector<2x128xi32>
        %863 = vector.shape_cast %860 : vector<2x1xf32> to vector<2x1xf32>
        %864 = vector.broadcast %863 : vector<2x1xf32> to vector<2x128xf32>
        %865 = arith.select %862, %864, %850 : vector<2x128xi1>, vector<2x128xf32>
        %c54 = arith.constant 54 : index
        %c0_324 = arith.constant 0 : index
        %866 = vector.load %arg5[%c54, %c0_324] : memref<64x128xf32, #tpu.memory_space<vmem>>, vector<1x128xf32>
        %867 = vector.broadcast %866 : vector<1x128xf32> to vector<2x128xf32>
        %868 = arith.mulf %865, %867 : vector<2x128xf32>
        %cst_325 = arith.constant dense<0.000000e+00> : vector<2xf32>
        %869 = vector.multi_reduction <add>, %868, %cst_325 [1] : vector<2x128xf32> to vector<2xf32>
        %870 = vector.shape_cast %869 : vector<2xf32> to vector<2x1xf32>
        %cst_326 = arith.constant 0.000000e+00 : f32
        %871 = vector.broadcast %cst_326 : f32 to vector<2x1xf32>
        %872 = arith.cmpf ogt, %870, %871 : vector<2x1xf32>
        %cst_327 = arith.constant 1.000000e+00 : f32
        %cst_328 = arith.constant -1.000000e+00 : f32
        %873 = vector.broadcast %cst_327 : f32 to vector<2x1xf32>
        %874 = vector.broadcast %cst_328 : f32 to vector<2x1xf32>
        %875 = arith.select %872, %873, %874 : vector<2x1xi1>, vector<2x1xf32>
        %c54_i32 = arith.constant 54 : i32
        %876 = vector.broadcast %c54_i32 : i32 to vector<2x128xi32>
        %877 = arith.cmpi eq, %20, %876 : vector<2x128xi32>
        %878 = vector.shape_cast %875 : vector<2x1xf32> to vector<2x1xf32>
        %879 = vector.broadcast %878 : vector<2x1xf32> to vector<2x128xf32>
        %880 = arith.select %877, %879, %865 : vector<2x128xi1>, vector<2x128xf32>
        %c55 = arith.constant 55 : index
        %c0_329 = arith.constant 0 : index
        %881 = vector.load %arg5[%c55, %c0_329] : memref<64x128xf32, #tpu.memory_space<vmem>>, vector<1x128xf32>
        %882 = vector.broadcast %881 : vector<1x128xf32> to vector<2x128xf32>
        %883 = arith.mulf %880, %882 : vector<2x128xf32>
        %cst_330 = arith.constant dense<0.000000e+00> : vector<2xf32>
        %884 = vector.multi_reduction <add>, %883, %cst_330 [1] : vector<2x128xf32> to vector<2xf32>
        %885 = vector.shape_cast %884 : vector<2xf32> to vector<2x1xf32>
        %cst_331 = arith.constant 0.000000e+00 : f32
        %886 = vector.broadcast %cst_331 : f32 to vector<2x1xf32>
        %887 = arith.cmpf ogt, %885, %886 : vector<2x1xf32>
        %cst_332 = arith.constant 1.000000e+00 : f32
        %cst_333 = arith.constant -1.000000e+00 : f32
        %888 = vector.broadcast %cst_332 : f32 to vector<2x1xf32>
        %889 = vector.broadcast %cst_333 : f32 to vector<2x1xf32>
        %890 = arith.select %887, %888, %889 : vector<2x1xi1>, vector<2x1xf32>
        %c55_i32 = arith.constant 55 : i32
        %891 = vector.broadcast %c55_i32 : i32 to vector<2x128xi32>
        %892 = arith.cmpi eq, %20, %891 : vector<2x128xi32>
        %893 = vector.shape_cast %890 : vector<2x1xf32> to vector<2x1xf32>
        %894 = vector.broadcast %893 : vector<2x1xf32> to vector<2x128xf32>
        %895 = arith.select %892, %894, %880 : vector<2x128xi1>, vector<2x128xf32>
        %c56 = arith.constant 56 : index
        %c0_334 = arith.constant 0 : index
        %896 = vector.load %arg5[%c56, %c0_334] : memref<64x128xf32, #tpu.memory_space<vmem>>, vector<1x128xf32>
        %897 = vector.broadcast %896 : vector<1x128xf32> to vector<2x128xf32>
        %898 = arith.mulf %895, %897 : vector<2x128xf32>
        %cst_335 = arith.constant dense<0.000000e+00> : vector<2xf32>
        %899 = vector.multi_reduction <add>, %898, %cst_335 [1] : vector<2x128xf32> to vector<2xf32>
        %900 = vector.shape_cast %899 : vector<2xf32> to vector<2x1xf32>
        %cst_336 = arith.constant 0.000000e+00 : f32
        %901 = vector.broadcast %cst_336 : f32 to vector<2x1xf32>
        %902 = arith.cmpf ogt, %900, %901 : vector<2x1xf32>
        %cst_337 = arith.constant 1.000000e+00 : f32
        %cst_338 = arith.constant -1.000000e+00 : f32
        %903 = vector.broadcast %cst_337 : f32 to vector<2x1xf32>
        %904 = vector.broadcast %cst_338 : f32 to vector<2x1xf32>
        %905 = arith.select %902, %903, %904 : vector<2x1xi1>, vector<2x1xf32>
        %c56_i32 = arith.constant 56 : i32
        %906 = vector.broadcast %c56_i32 : i32 to vector<2x128xi32>
        %907 = arith.cmpi eq, %20, %906 : vector<2x128xi32>
        %908 = vector.shape_cast %905 : vector<2x1xf32> to vector<2x1xf32>
        %909 = vector.broadcast %908 : vector<2x1xf32> to vector<2x128xf32>
        %910 = arith.select %907, %909, %895 : vector<2x128xi1>, vector<2x128xf32>
        %c57 = arith.constant 57 : index
        %c0_339 = arith.constant 0 : index
        %911 = vector.load %arg5[%c57, %c0_339] : memref<64x128xf32, #tpu.memory_space<vmem>>, vector<1x128xf32>
        %912 = vector.broadcast %911 : vector<1x128xf32> to vector<2x128xf32>
        %913 = arith.mulf %910, %912 : vector<2x128xf32>
        %cst_340 = arith.constant dense<0.000000e+00> : vector<2xf32>
        %914 = vector.multi_reduction <add>, %913, %cst_340 [1] : vector<2x128xf32> to vector<2xf32>
        %915 = vector.shape_cast %914 : vector<2xf32> to vector<2x1xf32>
        %cst_341 = arith.constant 0.000000e+00 : f32
        %916 = vector.broadcast %cst_341 : f32 to vector<2x1xf32>
        %917 = arith.cmpf ogt, %915, %916 : vector<2x1xf32>
        %cst_342 = arith.constant 1.000000e+00 : f32
        %cst_343 = arith.constant -1.000000e+00 : f32
        %918 = vector.broadcast %cst_342 : f32 to vector<2x1xf32>
        %919 = vector.broadcast %cst_343 : f32 to vector<2x1xf32>
        %920 = arith.select %917, %918, %919 : vector<2x1xi1>, vector<2x1xf32>
        %c57_i32 = arith.constant 57 : i32
        %921 = vector.broadcast %c57_i32 : i32 to vector<2x128xi32>
        %922 = arith.cmpi eq, %20, %921 : vector<2x128xi32>
        %923 = vector.shape_cast %920 : vector<2x1xf32> to vector<2x1xf32>
        %924 = vector.broadcast %923 : vector<2x1xf32> to vector<2x128xf32>
        %925 = arith.select %922, %924, %910 : vector<2x128xi1>, vector<2x128xf32>
        %c58 = arith.constant 58 : index
        %c0_344 = arith.constant 0 : index
        %926 = vector.load %arg5[%c58, %c0_344] : memref<64x128xf32, #tpu.memory_space<vmem>>, vector<1x128xf32>
        %927 = vector.broadcast %926 : vector<1x128xf32> to vector<2x128xf32>
        %928 = arith.mulf %925, %927 : vector<2x128xf32>
        %cst_345 = arith.constant dense<0.000000e+00> : vector<2xf32>
        %929 = vector.multi_reduction <add>, %928, %cst_345 [1] : vector<2x128xf32> to vector<2xf32>
        %930 = vector.shape_cast %929 : vector<2xf32> to vector<2x1xf32>
        %cst_346 = arith.constant 0.000000e+00 : f32
        %931 = vector.broadcast %cst_346 : f32 to vector<2x1xf32>
        %932 = arith.cmpf ogt, %930, %931 : vector<2x1xf32>
        %cst_347 = arith.constant 1.000000e+00 : f32
        %cst_348 = arith.constant -1.000000e+00 : f32
        %933 = vector.broadcast %cst_347 : f32 to vector<2x1xf32>
        %934 = vector.broadcast %cst_348 : f32 to vector<2x1xf32>
        %935 = arith.select %932, %933, %934 : vector<2x1xi1>, vector<2x1xf32>
        %c58_i32 = arith.constant 58 : i32
        %936 = vector.broadcast %c58_i32 : i32 to vector<2x128xi32>
        %937 = arith.cmpi eq, %20, %936 : vector<2x128xi32>
        %938 = vector.shape_cast %935 : vector<2x1xf32> to vector<2x1xf32>
        %939 = vector.broadcast %938 : vector<2x1xf32> to vector<2x128xf32>
        %940 = arith.select %937, %939, %925 : vector<2x128xi1>, vector<2x128xf32>
        %c59 = arith.constant 59 : index
        %c0_349 = arith.constant 0 : index
        %941 = vector.load %arg5[%c59, %c0_349] : memref<64x128xf32, #tpu.memory_space<vmem>>, vector<1x128xf32>
        %942 = vector.broadcast %941 : vector<1x128xf32> to vector<2x128xf32>
        %943 = arith.mulf %940, %942 : vector<2x128xf32>
        %cst_350 = arith.constant dense<0.000000e+00> : vector<2xf32>
        %944 = vector.multi_reduction <add>, %943, %cst_350 [1] : vector<2x128xf32> to vector<2xf32>
        %945 = vector.shape_cast %944 : vector<2xf32> to vector<2x1xf32>
        %cst_351 = arith.constant 0.000000e+00 : f32
        %946 = vector.broadcast %cst_351 : f32 to vector<2x1xf32>
        %947 = arith.cmpf ogt, %945, %946 : vector<2x1xf32>
        %cst_352 = arith.constant 1.000000e+00 : f32
        %cst_353 = arith.constant -1.000000e+00 : f32
        %948 = vector.broadcast %cst_352 : f32 to vector<2x1xf32>
        %949 = vector.broadcast %cst_353 : f32 to vector<2x1xf32>
        %950 = arith.select %947, %948, %949 : vector<2x1xi1>, vector<2x1xf32>
        %c59_i32 = arith.constant 59 : i32
        %951 = vector.broadcast %c59_i32 : i32 to vector<2x128xi32>
        %952 = arith.cmpi eq, %20, %951 : vector<2x128xi32>
        %953 = vector.shape_cast %950 : vector<2x1xf32> to vector<2x1xf32>
        %954 = vector.broadcast %953 : vector<2x1xf32> to vector<2x128xf32>
        %955 = arith.select %952, %954, %940 : vector<2x128xi1>, vector<2x128xf32>
        %c60 = arith.constant 60 : index
        %c0_354 = arith.constant 0 : index
        %956 = vector.load %arg5[%c60, %c0_354] : memref<64x128xf32, #tpu.memory_space<vmem>>, vector<1x128xf32>
        %957 = vector.broadcast %956 : vector<1x128xf32> to vector<2x128xf32>
        %958 = arith.mulf %955, %957 : vector<2x128xf32>
        %cst_355 = arith.constant dense<0.000000e+00> : vector<2xf32>
        %959 = vector.multi_reduction <add>, %958, %cst_355 [1] : vector<2x128xf32> to vector<2xf32>
        %960 = vector.shape_cast %959 : vector<2xf32> to vector<2x1xf32>
        %cst_356 = arith.constant 0.000000e+00 : f32
        %961 = vector.broadcast %cst_356 : f32 to vector<2x1xf32>
        %962 = arith.cmpf ogt, %960, %961 : vector<2x1xf32>
        %cst_357 = arith.constant 1.000000e+00 : f32
        %cst_358 = arith.constant -1.000000e+00 : f32
        %963 = vector.broadcast %cst_357 : f32 to vector<2x1xf32>
        %964 = vector.broadcast %cst_358 : f32 to vector<2x1xf32>
        %965 = arith.select %962, %963, %964 : vector<2x1xi1>, vector<2x1xf32>
        %c60_i32 = arith.constant 60 : i32
        %966 = vector.broadcast %c60_i32 : i32 to vector<2x128xi32>
        %967 = arith.cmpi eq, %20, %966 : vector<2x128xi32>
        %968 = vector.shape_cast %965 : vector<2x1xf32> to vector<2x1xf32>
        %969 = vector.broadcast %968 : vector<2x1xf32> to vector<2x128xf32>
        %970 = arith.select %967, %969, %955 : vector<2x128xi1>, vector<2x128xf32>
        %c61 = arith.constant 61 : index
        %c0_359 = arith.constant 0 : index
        %971 = vector.load %arg5[%c61, %c0_359] : memref<64x128xf32, #tpu.memory_space<vmem>>, vector<1x128xf32>
        %972 = vector.broadcast %971 : vector<1x128xf32> to vector<2x128xf32>
        %973 = arith.mulf %970, %972 : vector<2x128xf32>
        %cst_360 = arith.constant dense<0.000000e+00> : vector<2xf32>
        %974 = vector.multi_reduction <add>, %973, %cst_360 [1] : vector<2x128xf32> to vector<2xf32>
        %975 = vector.shape_cast %974 : vector<2xf32> to vector<2x1xf32>
        %cst_361 = arith.constant 0.000000e+00 : f32
        %976 = vector.broadcast %cst_361 : f32 to vector<2x1xf32>
        %977 = arith.cmpf ogt, %975, %976 : vector<2x1xf32>
        %cst_362 = arith.constant 1.000000e+00 : f32
        %cst_363 = arith.constant -1.000000e+00 : f32
        %978 = vector.broadcast %cst_362 : f32 to vector<2x1xf32>
        %979 = vector.broadcast %cst_363 : f32 to vector<2x1xf32>
        %980 = arith.select %977, %978, %979 : vector<2x1xi1>, vector<2x1xf32>
        %c61_i32 = arith.constant 61 : i32
        %981 = vector.broadcast %c61_i32 : i32 to vector<2x128xi32>
        %982 = arith.cmpi eq, %20, %981 : vector<2x128xi32>
        %983 = vector.shape_cast %980 : vector<2x1xf32> to vector<2x1xf32>
        %984 = vector.broadcast %983 : vector<2x1xf32> to vector<2x128xf32>
        %985 = arith.select %982, %984, %970 : vector<2x128xi1>, vector<2x128xf32>
        %c62 = arith.constant 62 : index
        %c0_364 = arith.constant 0 : index
        %986 = vector.load %arg5[%c62, %c0_364] : memref<64x128xf32, #tpu.memory_space<vmem>>, vector<1x128xf32>
        %987 = vector.broadcast %986 : vector<1x128xf32> to vector<2x128xf32>
        %988 = arith.mulf %985, %987 : vector<2x128xf32>
        %cst_365 = arith.constant dense<0.000000e+00> : vector<2xf32>
        %989 = vector.multi_reduction <add>, %988, %cst_365 [1] : vector<2x128xf32> to vector<2xf32>
        %990 = vector.shape_cast %989 : vector<2xf32> to vector<2x1xf32>
        %cst_366 = arith.constant 0.000000e+00 : f32
        %991 = vector.broadcast %cst_366 : f32 to vector<2x1xf32>
        %992 = arith.cmpf ogt, %990, %991 : vector<2x1xf32>
        %cst_367 = arith.constant 1.000000e+00 : f32
        %cst_368 = arith.constant -1.000000e+00 : f32
        %993 = vector.broadcast %cst_367 : f32 to vector<2x1xf32>
        %994 = vector.broadcast %cst_368 : f32 to vector<2x1xf32>
        %995 = arith.select %992, %993, %994 : vector<2x1xi1>, vector<2x1xf32>
        %c62_i32 = arith.constant 62 : i32
        %996 = vector.broadcast %c62_i32 : i32 to vector<2x128xi32>
        %997 = arith.cmpi eq, %20, %996 : vector<2x128xi32>
        %998 = vector.shape_cast %995 : vector<2x1xf32> to vector<2x1xf32>
        %999 = vector.broadcast %998 : vector<2x1xf32> to vector<2x128xf32>
        %1000 = arith.select %997, %999, %985 : vector<2x128xi1>, vector<2x128xf32>
        %c63 = arith.constant 63 : index
        %c0_369 = arith.constant 0 : index
        %1001 = vector.load %arg5[%c63, %c0_369] : memref<64x128xf32, #tpu.memory_space<vmem>>, vector<1x128xf32>
        %1002 = vector.broadcast %1001 : vector<1x128xf32> to vector<2x128xf32>
        %1003 = arith.mulf %1000, %1002 : vector<2x128xf32>
        %cst_370 = arith.constant dense<0.000000e+00> : vector<2xf32>
        %1004 = vector.multi_reduction <add>, %1003, %cst_370 [1] : vector<2x128xf32> to vector<2xf32>
        %1005 = vector.shape_cast %1004 : vector<2xf32> to vector<2x1xf32>
        %cst_371 = arith.constant 0.000000e+00 : f32
        %1006 = vector.broadcast %cst_371 : f32 to vector<2x1xf32>
        %1007 = arith.cmpf ogt, %1005, %1006 : vector<2x1xf32>
        %cst_372 = arith.constant 1.000000e+00 : f32
        %cst_373 = arith.constant -1.000000e+00 : f32
        %1008 = vector.broadcast %cst_372 : f32 to vector<2x1xf32>
        %1009 = vector.broadcast %cst_373 : f32 to vector<2x1xf32>
        %1010 = arith.select %1007, %1008, %1009 : vector<2x1xi1>, vector<2x1xf32>
        %c63_i32 = arith.constant 63 : i32
        %1011 = vector.broadcast %c63_i32 : i32 to vector<2x128xi32>
        %1012 = arith.cmpi eq, %20, %1011 : vector<2x128xi32>
        %1013 = vector.shape_cast %1010 : vector<2x1xf32> to vector<2x1xf32>
        %1014 = vector.broadcast %1013 : vector<2x1xf32> to vector<2x128xf32>
        %1015 = arith.select %1012, %1014, %1000 : vector<2x128xi1>, vector<2x128xf32>
        %c0_374 = arith.constant 0 : index
        %c0_375 = arith.constant 0 : index
        %1016 = vector.load %arg14[%c0_374, %c0_375] : memref<2x128xf32, #tpu.memory_space<vmem>>, vector<2x128xf32>
        tpu.vector_store %arg14[%c0_374, %c0_375], %1015 {strides = array<i32>} : memref<2x128xf32, #tpu.memory_space<vmem>>, vector<2x128xf32>,
        %1017 = arith.subf %1015, %55 : vector<2x128xf32>
        %1018 = math.absf %1017 : vector<2x128xf32>
        %1019 = vector.shape_cast %1018 : vector<2x128xf32> to vector<1x2x128xf32>
        %cst_376 = arith.constant dense<0.000000e+00> : vector<1xf32>
        %1020 = vector.multi_reduction <add>, %1019, %cst_376 [1, 2] : vector<1x2x128xf32> to vector<1xf32>
        %1021 = vector.shape_cast %1020 : vector<1xf32> to vector<1x1x1xf32>
        %1022 = vector.extract %1021[0, 0, 0] : f32 from vector<1x1x1xf32>
        %cst_377 = arith.constant 0.000000e+00 : f32
        %1023 = arith.cmpf ogt, %1022, %cst_377 : f32
        %1024 = arith.extui %1023 : i1 to i32
        %c0_378 = arith.constant 0 : index
        %1025 = memref.load %arg15[%c0_378] : memref<1xi32, #tpu.memory_space<smem>>
        memref.store %1024, %arg15[%c0_378] : memref<1xi32, #tpu.memory_space<smem>>
      } else {
      }
    }
    %c0_18 = arith.constant 0 : index
    %c0_19 = arith.constant 0 : index
    %22 = vector.load %arg14[%c0_18, %c0_19] : memref<2x128xf32, #tpu.memory_space<vmem>>, vector<2x128xf32>
    %cst_20 = arith.constant 0.000000e+00 : f32
    %23 = vector.broadcast %cst_20 : f32 to vector<2x128xf32>
    %24 = arith.cmpf ogt, %22, %23 : vector<2x128xf32>
    %cst_21 = arith.constant 1.000000e+00 : f32
    %cst_22 = arith.constant 0.000000e+00 : f32
    %25 = vector.broadcast %cst_21 : f32 to vector<2x128xf32>
    %26 = vector.broadcast %cst_22 : f32 to vector<2x128xf32>
    %27 = arith.select %24, %25, %26 : vector<2x128xi1>, vector<2x128xf32>
    %c0_23 = arith.constant 0 : index
    %c0_24 = arith.constant 0 : index
    %28 = vector.load %arg6[%c0_23, %c0_24] : memref<16x32xf32, #tpu.memory_space<vmem>>, vector<16x32xf32>
    %cst_25 = arith.constant dense<0.000000e+00> : vector<2x32xf32>
    %29 = tpu.matmul %0, %28, %cst_25 {dimension_numbers = #tpu.dot_dimension_numbers<[1], [0], [0], [1], [0, 0, 1, 1], [], []>} : vector<2x16xf32>, vector<16x32xf32>, vector<2x32xf32> -> vector<2x32xf32>
    %c0_26 = arith.constant 0 : index
    %c0_27 = arith.constant 0 : index
    %30 = vector.load %arg7[%c0_26, %c0_27] : memref<128x32xf32, #tpu.memory_space<vmem>>, vector<128x32xf32>
    %cst_28 = arith.constant dense<0.000000e+00> : vector<2x32xf32>
    %31 = tpu.matmul %27, %30, %cst_28 {dimension_numbers = #tpu.dot_dimension_numbers<[1], [0], [0], [1], [0, 0, 1, 1], [], []>} : vector<2x128xf32>, vector<128x32xf32>, vector<2x32xf32> -> vector<2x32xf32>
    %32 = arith.addf %29, %31 : vector<2x32xf32>
    %c0_29 = arith.constant 0 : index
    %c0_30 = arith.constant 0 : index
    %33 = vector.load %arg8[%c0_29, %c0_30] : memref<1x32xf32, #tpu.memory_space<vmem>>, vector<1x32xf32>
    %34 = vector.broadcast %33 : vector<1x32xf32> to vector<2x32xf32>
    %35 = arith.addf %32, %34 : vector<2x32xf32>
    %cst_31 = arith.constant 0.000000e+00 : f32
    %36 = vector.broadcast %cst_31 : f32 to vector<2x32xf32>
    %37 = arith.maximumf %35, %36 : vector<2x32xf32>
    %c0_32 = arith.constant 0 : index
    %c0_33 = arith.constant 0 : index
    %38 = vector.load %arg9[%c0_32, %c0_33] : memref<32x32xf32, #tpu.memory_space<vmem>>, vector<32x32xf32>
    %cst_34 = arith.constant dense<0.000000e+00> : vector<2x32xf32>
    %39 = tpu.matmul %37, %38, %cst_34 {dimension_numbers = #tpu.dot_dimension_numbers<[1], [0], [0], [1], [0, 0, 1, 1], [], []>} : vector<2x32xf32>, vector<32x32xf32>, vector<2x32xf32> -> vector<2x32xf32>
    %c0_35 = arith.constant 0 : index
    %c0_36 = arith.constant 0 : index
    %40 = vector.load %arg10[%c0_35, %c0_36] : memref<1x32xf32, #tpu.memory_space<vmem>>, vector<1x32xf32>
    %41 = vector.broadcast %40 : vector<1x32xf32> to vector<2x32xf32>
    %42 = arith.addf %39, %41 : vector<2x32xf32>
    %cst_37 = arith.constant 0.000000e+00 : f32
    %43 = vector.broadcast %cst_37 : f32 to vector<2x32xf32>
    %44 = arith.maximumf %42, %43 : vector<2x32xf32>
    %c0_38 = arith.constant 0 : index
    %c0_39 = arith.constant 0 : index
    %45 = vector.load %arg11[%c0_38, %c0_39] : memref<32x2xf32, #tpu.memory_space<vmem>>, vector<32x2xf32>
    %cst_40 = arith.constant dense<0.000000e+00> : vector<2x2xf32>
    %46 = tpu.matmul %44, %45, %cst_40 {dimension_numbers = #tpu.dot_dimension_numbers<[1], [0], [0], [1], [0, 0, 1, 1], [], []>} : vector<2x32xf32>, vector<32x2xf32>, vector<2x2xf32> -> vector<2x2xf32>
    %c0_41 = arith.constant 0 : index
    %c0_42 = arith.constant 0 : index
    %47 = vector.load %arg12[%c0_41, %c0_42] : memref<1x2xf32, #tpu.memory_space<vmem>>, vector<1x2xf32>
    %48 = vector.broadcast %47 : vector<1x2xf32> to vector<2x2xf32>
    %49 = arith.addf %46, %48 : vector<2x2xf32>
    %c0_43 = arith.constant 0 : index
    %c0_44 = arith.constant 0 : index
    %50 = vector.load %arg13[%c0_43, %c0_44] : memref<2x2xf32, #tpu.memory_space<vmem>>, vector<2x2xf32>
    tpu.vector_store %arg13[%c0_43, %c0_44], %49 {strides = array<i32>} : memref<2x2xf32, #tpu.memory_space<vmem>>, vector<2x2xf32>,
    return
  }
}

</mosaic_0001>

<llo_original>
// kernel: tpu_custom_call.1
$region0: #{tpu_custom_call.1}
  #allocation0 [shape = 'u32[]', space=smem, size = 0x4, offset = 0x4, fixed_abs, tag = 'smem constant byte address 0x4 - core index']
  #allocation1 [shape = 'u32[72,128]{1,0:T(1,128)}', space=vmem, size = 0x9000, scoped, tag = 'internal scratch']
  #allocation2 [shape = 'f32[2,128]{1,0:T(2,128)}', space=vmem, size = 0x400, scoped, tag = 'scratch operand']
  #allocation3 [shape = 's32[1]{0:T(128)}', space=smem, size = 0x200, scoped, tag = 'scratch operand']
  %s0 = inlined_call_operand.vmem [shape: f32[2,16], index: 0, kind: input, shape index: {}]
  %s1 = inlined_call_operand.vmem [shape: f32[16,32], index: 1, kind: input, shape index: {}]
  %s2 = inlined_call_operand.vmem [shape: f32[1,32], index: 2, kind: input, shape index: {}]
  %s3 = inlined_call_operand.vmem [shape: f32[32,128], index: 3, kind: input, shape index: {}]
  %s4 = inlined_call_operand.vmem [shape: f32[1,128], index: 4, kind: input, shape index: {}]
  %s5 = inlined_call_operand.vmem [shape: f32[64,128], index: 5, kind: input, shape index: {}]
  %s6 = inlined_call_operand.vmem [shape: f32[16,32], index: 6, kind: input, shape index: {}]
  %s7 = inlined_call_operand.vmem [shape: f32[128,32], index: 7, kind: input, shape index: {}]
  %s8 = inlined_call_operand.vmem [shape: f32[1,32], index: 8, kind: input, shape index: {}]
  %s9 = inlined_call_operand.vmem [shape: f32[32,32], index: 9, kind: input, shape index: {}]
  %s10 = inlined_call_operand.vmem [shape: f32[1,32], index: 10, kind: input, shape index: {}]
  %s11 = inlined_call_operand.vmem [shape: f32[32,2], index: 11, kind: input, shape index: {}]
  %s12 = inlined_call_operand.vmem [shape: f32[1,2], index: 12, kind: input, shape index: {}]
  %s13 = inlined_call_operand.hbm [shape: f32[2,2], index: 13, kind: output, shape index: {}]
  %s14 = sld [smem:[#allocation0]]
  $region73: #{tpu_custom_call.1} parent=0
    _
  %s16 = ssub.s32 1, %s14
  %s17 = scalar_select 0, %s16, %s14
  $region1: #{tpu_custom_call.1} parent=0
    #allocation4 [shape = 'u8[1024]{0}', space=vmem, size = 0x400, scoped, tag = 'output window, operand 0, single buffered']
    #allocation5 [shape = 's32[1]{0}', space=sflag, size = 0x4, scoped, tag = 'scoped memory for tpu_custom_call.1']
    %18 = vsyncpa [#allocation5], 0
    // Predicated region
    $region2: #{tpu_custom_call.1} parent=1 // pred_check
      _
    $region3: #{tpu_custom_call.1} parent=1 // pred_check_branch
      %20 = sbr.rel (0) target = $region5
    $region4: #{tpu_custom_call.1} parent=1 // pred_region
      _
    $region5: #{tpu_custom_call.1} parent=1 // pred_fallthru
      _
    // Predicated region
    $region6: #{tpu_custom_call.1} parent=1 // pred_check
      _
    $region7: #{tpu_custom_call.1} parent=1 // pred_check_branch
      %22 = sbr.rel (0) target = $region9
    $region8: #{tpu_custom_call.1} parent=1 // pred_region
      _
    $region9: #{tpu_custom_call.1} parent=1 // pred_fallthru
      _
    // Predicated region
    $region10: #{tpu_custom_call.1} parent=1 // pred_check
      _
    $region11: #{tpu_custom_call.1} parent=1 // pred_check_branch
      %24 = sbr.rel (0) target = $region13
    $region12: #{tpu_custom_call.1} parent=1 // pred_region
      _
    $region13: #{tpu_custom_call.1} parent=1 // pred_fallthru
      _
    // Predicated region
    $region14: #{tpu_custom_call.1} parent=1 // pred_check
      _
    $region15: #{tpu_custom_call.1} parent=1 // pred_check_branch
      %26 = sbr.rel (0) target = $region17
    $region16: #{tpu_custom_call.1} parent=1 // pred_region
      _
    $region17: #{tpu_custom_call.1} parent=1 // pred_fallthru
      _
    // Predicated region
    $region18: #{tpu_custom_call.1} parent=1 // pred_check
      _
    $region19: #{tpu_custom_call.1} parent=1 // pred_check_branch
      %28 = sbr.rel (0) target = $region21
    $region20: #{tpu_custom_call.1} parent=1 // pred_region
      _
    $region21: #{tpu_custom_call.1} parent=1 // pred_fallthru
      _
    // Predicated region
    $region22: #{tpu_custom_call.1} parent=1 // pred_check
      _
    $region23: #{tpu_custom_call.1} parent=1 // pred_check_branch
      %30 = sbr.rel (0) target = $region25
    $region24: #{tpu_custom_call.1} parent=1 // pred_region
      _
    $region25: #{tpu_custom_call.1} parent=1 // pred_fallthru
      _
    // Predicated region
    $region26: #{tpu_custom_call.1} parent=1 // pred_check
      _
    $region27: #{tpu_custom_call.1} parent=1 // pred_check_branch
      %32 = sbr.rel (0) target = $region29
    $region28: #{tpu_custom_call.1} parent=1 // pred_region
      _
    $region29: #{tpu_custom_call.1} parent=1 // pred_fallthru
      _
    // Predicated region
    $region30: #{tpu_custom_call.1} parent=1 // pred_check
      _
    $region31: #{tpu_custom_call.1} parent=1 // pred_check_branch
      %34 = sbr.rel (0) target = $region33
    $region32: #{tpu_custom_call.1} parent=1 // pred_region
      _
    $region33: #{tpu_custom_call.1} parent=1 // pred_fallthru
      _
    // Predicated region
    $region34: #{tpu_custom_call.1} parent=1 // pred_check
      _
    $region35: #{tpu_custom_call.1} parent=1 // pred_check_branch
      %36 = sbr.rel (0) target = $region37
    $region36: #{tpu_custom_call.1} parent=1 // pred_region
      _
    $region37: #{tpu_custom_call.1} parent=1 // pred_fallthru
      _
    // Predicated region
    $region38: #{tpu_custom_call.1} parent=1 // pred_check
      _
    $region39: #{tpu_custom_call.1} parent=1 // pred_check_branch
      %38 = sbr.rel (0) target = $region41
    $region40: #{tpu_custom_call.1} parent=1 // pred_region
      _
    $region41: #{tpu_custom_call.1} parent=1 // pred_fallthru
      _
    // Predicated region
    $region42: #{tpu_custom_call.1} parent=1 // pred_check
      _
    $region43: #{tpu_custom_call.1} parent=1 // pred_check_branch
      %40 = sbr.rel (0) target = $region45
    $region44: #{tpu_custom_call.1} parent=1 // pred_region
      _
    $region45: #{tpu_custom_call.1} parent=1 // pred_fallthru
      _
    // Predicated region
    $region46: #{tpu_custom_call.1} parent=1 // pred_check
      _
    $region47: #{tpu_custom_call.1} parent=1 // pred_check_branch
      %42 = sbr.rel (0) target = $region49
    $region48: #{tpu_custom_call.1} parent=1 // pred_region
      _
    $region49: #{tpu_custom_call.1} parent=1 // pred_fallthru
      _
    // Predicated region
    $region50: #{tpu_custom_call.1} parent=1 // pred_check
      _
    $region51: #{tpu_custom_call.1} parent=1 // pred_check_branch
      %44 = sbr.rel (0) target = $region53
    $region52: #{tpu_custom_call.1} parent=1 // pred_region
      _
    $region53: #{tpu_custom_call.1} parent=1 // pred_fallthru
      _
    %v45 = vld [vmem:[%s0] sm:$0x3]
    %v46 = vld [vmem:[%s1] sm:$0xff]
    %v47 = vld [vmem:[%s1 + $0x8] sm:$0xff]
    %v48 = vld [vmem:[%s2] sm:$0x1]
    %v50 = vperm.slane %v48, 0
    %vm52 = vcmask 130048
    %v54 = vsel %vm52, %v45, 0
    %56 = vmatpush.msra.mxu0 0.0
    %57 = vmatpush.msra.mxu0 0.0
    %58 = vmatpush.msra.mxu0 0.0
    %59 = vmatpush.msra.mxu0 0.0
    %60 = vmatpush.msra.mxu0 0.0
    %61 = vmatpush.msra.mxu0 0.0
    %62 = vmatpush.msra.mxu0 0.0
    %63 = vmatpush.msra.mxu0 0.0
    %64 = vmatpush.msra.mxu0 0.0
    %65 = vmatpush.msra.mxu0 0.0
    %66 = vmatpush.msra.mxu0 0.0
    %67 = vmatpush.msra.mxu0 0.0
    %68 = vmatpush.msra.mxu0 0.0
    %69 = vmatpush.msra.mxu0 0.0
    %70 = vmatpush.msra.mxu0 %v47
    %71 = vmatpush.msra.mxu0 %v46
    %72 = vmatmul.f32.gmra.mxu0 %v54
    %v73 = vpop.f32.mrf.mxu0
    %v74 = vadd.f32 %v50, %v73
    %75 = vdwg.mxu0
    %v76 = vmax.f32 %v74, 0.0
    %v77 = vld [vmem:[%s3] sm:$0xff]
    %v78 = vld [vmem:[%s3 + $0x8] sm:$0xff]
    %v79 = vld [vmem:[%s3 + $0x10] sm:$0xff]
    %v80 = vld [vmem:[%s3 + $0x18] sm:$0xff]
    %v81 = vld [vmem:[%s4] sm:$0x1]
    %v83 = vperm.slane %v81, 0
    %vm85 = vcmask 261120
    %v87 = vsel %vm85, %v76, 0
    %89 = vmatpush.msra.mxu0 0.0
    %90 = vmatpush.msra.mxu0 0.0
    %91 = vmatpush.msra.mxu0 0.0
    %92 = vmatpush.msra.mxu0 0.0
    %93 = vmatpush.msra.mxu0 0.0
    %94 = vmatpush.msra.mxu0 0.0
    %95 = vmatpush.msra.mxu0 0.0
    %96 = vmatpush.msra.mxu0 0.0
    %97 = vmatpush.msra.mxu0 0.0
    %98 = vmatpush.msra.mxu0 0.0
    %99 = vmatpush.msra.mxu0 0.0
    %100 = vmatpush.msra.mxu0 0.0
    %101 = vmatpush.msra.mxu0 %v80
    %102 = vmatpush.msra.mxu0 %v79
    %103 = vmatpush.msra.mxu0 %v78
    %104 = vmatpush.msra.mxu0 %v77
    %105 = vmatmul.f32.gmra.mxu0 %v87
    %v106 = vpop.f32.mrf.mxu0
    %v107 = vadd.f32 %v83, %v106
    %108 = vdwg.mxu0
    %vm109 = vcmp.gt.f32.partialorder %v107, 0.0
    %v110 = vsel %vm109, 1.0, -1.0
    %111 = vst [vmem:[#allocation2] sm:$0x3] %v110
    %s112 = scalar_lea.smem [#allocation3], 0
    %113 = sst [smem:[%s112]] 1
    %v114 = vlaneseq
    %v115 = vand.u32 %v114, 127
    loop: start=0, step=1, limit=10
    $region54: #{tpu_custom_call.1} parent=1 // loop_pre_header
      _
    $region55: #{tpu_custom_call.1} parent=1 // loop_header
      %s117 = sphi 0, %s121
      %p118 = scmp.ge.s32.totalorder %s117, 10
    $region56: #{tpu_custom_call.1} parent=1 // loop_header_branch
      %120 = sbr.rel (%p118) target = $region60
    $region57: #{tpu_custom_call.1} parent=1 // loop_body
      %s122 = sld [smem:[#allocation3]]
      %p123 = scmp.ne.s32.totalorder %s122, 0
      // Predicated region
      $region61: #{tpu_custom_call.1} parent=57 // pred_check
        %p124 = pneg %p123
      $region62: #{tpu_custom_call.1} parent=57 // pred_check_branch
        %126 = sbr.rel (%p124) target = $region64
      $region63: #{tpu_custom_call.1} parent=57 // pred_region
        %v127 = vld [vmem:[#allocation2] sm:$0x3]
        %v128 = vld [vmem:[%s5] sm:$0x1]
        %v129 = vperm.slane %v128, 0
        %v130 = vmul.f32 %v127, %v129
        %vm131 = vcmask 1041408
        %v132 = vsel %vm131, %v130, 0.0
        %133 = vadd.xlane.f32.xlu0 %v132
        %v134 = vpop.xlane.xlu0 %133
        %vm135 = vcmp.gt.f32.partialorder %v134, 0.0
        %v136 = vsel %vm135, 1.0, -1.0
        %vm137 = vcmp.eq.s32.totalorder %v115, 0
        %v138 = vsel %vm137, %v136, %v127
        %v139 = vld [vmem:[%s5 + $0x1] sm:$0x1]
        %v140 = vperm.slane %v139, 0
        %v141 = vmul.f32 %v138, %v140
        %v142 = vsel %vm131, %v141, 0.0
        %143 = vadd.xlane.f32.xlu0 %v142
        %v144 = vpop.xlane.xlu0 %143
        %vm145 = vcmp.gt.f32.partialorder %v144, 0.0
        %v146 = vsel %vm145, 1.0, -1.0
        %vm147 = vcmp.eq.s32.totalorder %v115, 1
        %v148 = vsel %vm147, %v146, %v138
        %v149 = vld [vmem:[%s5 + $0x2] sm:$0x1]
        %v150 = vperm.slane %v149, 0
        %v151 = vmul.f32 %v148, %v150
        %v152 = vsel %vm131, %v151, 0.0
        %153 = vadd.xlane.f32.xlu0 %v152
        %v154 = vpop.xlane.xlu0 %153
        %vm155 = vcmp.gt.f32.partialorder %v154, 0.0
        %v156 = vsel %vm155, 1.0, -1.0
        %vm157 = vcmp.eq.s32.totalorder %v115, 2
        %v158 = vsel %vm157, %v156, %v148
        %v159 = vld [vmem:[%s5 + $0x3] sm:$0x1]
        %v160 = vperm.slane %v159, 0
        %v161 = vmul.f32 %v158, %v160
        %v162 = vsel %vm131, %v161, 0.0
        %163 = vadd.xlane.f32.xlu0 %v162
        %v164 = vpop.xlane.xlu0 %163
        %vm165 = vcmp.gt.f32.partialorder %v164, 0.0
        %v166 = vsel %vm165, 1.0, -1.0
        %vm167 = vcmp.eq.s32.totalorder %v115, 3
        %v168 = vsel %vm167, %v166, %v158
        %v169 = vld [vmem:[%s5 + $0x4] sm:$0x1]
        %v170 = vperm.slane %v169, 0
        %v171 = vmul.f32 %v168, %v170
        %v172 = vsel %vm131, %v171, 0.0
        %173 = vadd.xlane.f32.xlu0 %v172
        %v174 = vpop.xlane.xlu0 %173
        %vm175 = vcmp.gt.f32.partialorder %v174, 0.0
        %v176 = vsel %vm175, 1.0, -1.0
        %vm177 = vcmp.eq.s32.totalorder %v115, 4
        %v178 = vsel %vm177, %v176, %v168
        %v179 = vld [vmem:[%s5 + $0x5] sm:$0x1]
        %v180 = vperm.slane %v179, 0
        %v181 = vmul.f32 %v178, %v180
        %v182 = vsel %vm131, %v181, 0.0
        %183 = vadd.xlane.f32.xlu0 %v182
        %v184 = vpop.xlane.xlu0 %183
        %vm185 = vcmp.gt.f32.partialorder %v184, 0.0
        %v186 = vsel %vm185, 1.0, -1.0
        %vm187 = vcmp.eq.s32.totalorder %v115, 5
        %v188 = vsel %vm187, %v186, %v178
        %v189 = vld [vmem:[%s5 + $0x6] sm:$0x1]
        %v190 = vperm.slane %v189, 0
        %v191 = vmul.f32 %v188, %v190
        %v192 = vsel %vm131, %v191, 0.0
        %193 = vadd.xlane.f32.xlu0 %v192
        %v194 = vpop.xlane.xlu0 %193
        %vm195 = vcmp.gt.f32.partialorder %v194, 0.0
        %v196 = vsel %vm195, 1.0, -1.0
        %vm197 = vcmp.eq.s32.totalorder %v115, 6
        %v198 = vsel %vm197, %v196, %v188
        %v199 = vld [vmem:[%s5 + $0x7] sm:$0x1]
        %v200 = vperm.slane %v199, 0
        %v201 = vmul.f32 %v198, %v200
        %v202 = vsel %vm131, %v201, 0.0
        %203 = vadd.xlane.f32.xlu0 %v202
        %v204 = vpop.xlane.xlu0 %203
        %vm205 = vcmp.gt.f32.partialorder %v204, 0.0
        %v206 = vsel %vm205, 1.0, -1.0
        %vm207 = vcmp.eq.s32.totalorder %v115, 7
        %v208 = vsel %vm207, %v206, %v198
        %v209 = vld [vmem:[%s5 + $0x8] sm:$0x1]
        %v210 = vperm.slane %v209, 0
        %v211 = vmul.f32 %v208, %v210
        %v212 = vsel %vm131, %v211, 0.0
        %213 = vadd.xlane.f32.xlu0 %v212
        %v214 = vpop.xlane.xlu0 %213
        %vm215 = vcmp.gt.f32.partialorder %v214, 0.0
        %v216 = vsel %vm215, 1.0, -1.0
        %vm217 = vcmp.eq.s32.totalorder %v115, 8
        %v218 = vsel %vm217, %v216, %v208
        %v219 = vld [vmem:[%s5 + $0x9] sm:$0x1]
        %v220 = vperm.slane %v219, 0
        %v221 = vmul.f32 %v218, %v220
        %v222 = vsel %vm131, %v221, 0.0
        %223 = vadd.xlane.f32.xlu0 %v222
        %v224 = vpop.xlane.xlu0 %223
        %vm225 = vcmp.gt.f32.partialorder %v224, 0.0
        %v226 = vsel %vm225, 1.0, -1.0
        %vm227 = vcmp.eq.s32.totalorder %v115, 9
        %v228 = vsel %vm227, %v226, %v218
        %v229 = vld [vmem:[%s5 + $0xa] sm:$0x1]
        %v230 = vperm.slane %v229, 0
        %v231 = vmul.f32 %v228, %v230
        %v232 = vsel %vm131, %v231, 0.0
        %233 = vadd.xlane.f32.xlu0 %v232
        %v234 = vpop.xlane.xlu0 %233
        %vm235 = vcmp.gt.f32.partialorder %v234, 0.0
        %v236 = vsel %vm235, 1.0, -1.0
        %vm237 = vcmp.eq.s32.totalorder %v115, 10
        %v238 = vsel %vm237, %v236, %v228
        %v239 = vld [vmem:[%s5 + $0xb] sm:$0x1]
        %v240 = vperm.slane %v239, 0
        %v241 = vmul.f32 %v238, %v240
        %v242 = vsel %vm131, %v241, 0.0
        %243 = vadd.xlane.f32.xlu0 %v242
        %v244 = vpop.xlane.xlu0 %243
        %vm245 = vcmp.gt.f32.partialorder %v244, 0.0
        %v246 = vsel %vm245, 1.0, -1.0
        %vm247 = vcmp.eq.s32.totalorder %v115, 11
        %v248 = vsel %vm247, %v246, %v238
        %v249 = vld [vmem:[%s5 + $0xc] sm:$0x1]
        %v250 = vperm.slane %v249, 0
        %v251 = vmul.f32 %v248, %v250
        %v252 = vsel %vm131, %v251, 0.0
        %253 = vadd.xlane.f32.xlu0 %v252
        %v254 = vpop.xlane.xlu0 %253
        %vm255 = vcmp.gt.f32.partialorder %v254, 0.0
        %v256 = vsel %vm255, 1.0, -1.0
        %vm257 = vcmp.eq.s32.totalorder %v115, 12
        %v258 = vsel %vm257, %v256, %v248
        %v259 = vld [vmem:[%s5 + $0xd] sm:$0x1]
        %v260 = vperm.slane %v259, 0
        %v261 = vmul.f32 %v258, %v260
        %v262 = vsel %vm131, %v261, 0.0
        %263 = vadd.xlane.f32.xlu0 %v262
        %v264 = vpop.xlane.xlu0 %263
        %vm265 = vcmp.gt.f32.partialorder %v264, 0.0
        %v266 = vsel %vm265, 1.0, -1.0
        %vm267 = vcmp.eq.s32.totalorder %v115, 13
        %v268 = vsel %vm267, %v266, %v258
        %v269 = vld [vmem:[%s5 + $0xe] sm:$0x1]
        %v270 = vperm.slane %v269, 0
        %v271 = vmul.f32 %v268, %v270
        %v272 = vsel %vm131, %v271, 0.0
        %273 = vadd.xlane.f32.xlu0 %v272
        %v274 = vpop.xlane.xlu0 %273
        %vm275 = vcmp.gt.f32.partialorder %v274, 0.0
        %v276 = vsel %vm275, 1.0, -1.0
        %vm277 = vcmp.eq.s32.totalorder %v115, 14
        %v278 = vsel %vm277, %v276, %v268
        %v279 = vld [vmem:[%s5 + $0xf] sm:$0x1]
        %v280 = vperm.slane %v279, 0
        %v281 = vmul.f32 %v278, %v280
        %v282 = vsel %vm131, %v281, 0.0
        %283 = vadd.xlane.f32.xlu0 %v282
        %v284 = vpop.xlane.xlu0 %283
        %vm285 = vcmp.gt.f32.partialorder %v284, 0.0
        %v286 = vsel %vm285, 1.0, -1.0
        %vm287 = vcmp.eq.s32.totalorder %v115, 15
        %v288 = vsel %vm287, %v286, %v278
        %v289 = vld [vmem:[%s5 + $0x10] sm:$0x1]
        %v290 = vperm.slane %v289, 0
        %v291 = vmul.f32 %v288, %v290
        %v292 = vsel %vm131, %v291, 0.0
        %293 = vadd.xlane.f32.xlu0 %v292
        %v294 = vpop.xlane.xlu0 %293
        %vm295 = vcmp.gt.f32.partialorder %v294, 0.0
        %v296 = vsel %vm295, 1.0, -1.0
        %vm297 = vcmp.eq.s32.totalorder %v115, 16
        %v298 = vsel %vm297, %v296, %v288
        %v299 = vld [vmem:[%s5 + $0x11] sm:$0x1]
        %v300 = vperm.slane %v299, 0
        %v301 = vmul.f32 %v298, %v300
        %v302 = vsel %vm131, %v301, 0.0
        %303 = vadd.xlane.f32.xlu0 %v302
        %v304 = vpop.xlane.xlu0 %303
        %vm305 = vcmp.gt.f32.partialorder %v304, 0.0
        %v306 = vsel %vm305, 1.0, -1.0
        %vm307 = vcmp.eq.s32.totalorder %v115, 17
        %v308 = vsel %vm307, %v306, %v298
        %v309 = vld [vmem:[%s5 + $0x12] sm:$0x1]
        %v310 = vperm.slane %v309, 0
        %v311 = vmul.f32 %v308, %v310
        %v312 = vsel %vm131, %v311, 0.0
        %313 = vadd.xlane.f32.xlu0 %v312
        %v314 = vpop.xlane.xlu0 %313
        %vm315 = vcmp.gt.f32.partialorder %v314, 0.0
        %v316 = vsel %vm315, 1.0, -1.0
        %vm317 = vcmp.eq.s32.totalorder %v115, 18
        %v318 = vsel %vm317, %v316, %v308
        %v319 = vld [vmem:[%s5 + $0x13] sm:$0x1]
        %v320 = vperm.slane %v319, 0
        %v321 = vmul.f32 %v318, %v320
        %v322 = vsel %vm131, %v321, 0.0
        %323 = vadd.xlane.f32.xlu0 %v322
        %v324 = vpop.xlane.xlu0 %323
        %vm325 = vcmp.gt.f32.partialorder %v324, 0.0
        %v326 = vsel %vm325, 1.0, -1.0
        %vm327 = vcmp.eq.s32.totalorder %v115, 19
        %v328 = vsel %vm327, %v326, %v318
        %v329 = vld [vmem:[%s5 + $0x14] sm:$0x1]
        %v330 = vperm.slane %v329, 0
        %v331 = vmul.f32 %v328, %v330
        %v332 = vsel %vm131, %v331, 0.0
        %333 = vadd.xlane.f32.xlu0 %v332
        %v334 = vpop.xlane.xlu0 %333
        %vm335 = vcmp.gt.f32.partialorder %v334, 0.0
        %v336 = vsel %vm335, 1.0, -1.0
        %vm337 = vcmp.eq.s32.totalorder %v115, 20
        %v338 = vsel %vm337, %v336, %v328
        %v339 = vld [vmem:[%s5 + $0x15] sm:$0x1]
        %v340 = vperm.slane %v339, 0
        %v341 = vmul.f32 %v338, %v340
        %v342 = vsel %vm131, %v341, 0.0
        %343 = vadd.xlane.f32.xlu0 %v342
        %v344 = vpop.xlane.xlu0 %343
        %vm345 = vcmp.gt.f32.partialorder %v344, 0.0
        %v346 = vsel %vm345, 1.0, -1.0
        %vm347 = vcmp.eq.s32.totalorder %v115, 21
        %v348 = vsel %vm347, %v346, %v338
        %v349 = vld [vmem:[%s5 + $0x16] sm:$0x1]
        %v350 = vperm.slane %v349, 0
        %v351 = vmul.f32 %v348, %v350
        %v352 = vsel %vm131, %v351, 0.0
        %353 = vadd.xlane.f32.xlu0 %v352
        %v354 = vpop.xlane.xlu0 %353
        %vm355 = vcmp.gt.f32.partialorder %v354, 0.0
        %v356 = vsel %vm355, 1.0, -1.0
        %vm357 = vcmp.eq.s32.totalorder %v115, 22
        %v358 = vsel %vm357, %v356, %v348
        %v359 = vld [vmem:[%s5 + $0x17] sm:$0x1]
        %v360 = vperm.slane %v359, 0
        %v361 = vmul.f32 %v358, %v360
        %v362 = vsel %vm131, %v361, 0.0
        %363 = vadd.xlane.f32.xlu0 %v362
        %v364 = vpop.xlane.xlu0 %363
        %vm365 = vcmp.gt.f32.partialorder %v364, 0.0
        %v366 = vsel %vm365, 1.0, -1.0
        %vm367 = vcmp.eq.s32.totalorder %v115, 23
        %v368 = vsel %vm367, %v366, %v358
        %v369 = vld [vmem:[%s5 + $0x18] sm:$0x1]
        %v370 = vperm.slane %v369, 0
        %v371 = vmul.f32 %v368, %v370
        %v372 = vsel %vm131, %v371, 0.0
        %373 = vadd.xlane.f32.xlu0 %v372
        %v374 = vpop.xlane.xlu0 %373
        %vm375 = vcmp.gt.f32.partialorder %v374, 0.0
        %v376 = vsel %vm375, 1.0, -1.0
        %vm377 = vcmp.eq.s32.totalorder %v115, 24
        %v378 = vsel %vm377, %v376, %v368
        %v379 = vld [vmem:[%s5 + $0x19] sm:$0x1]
        %v380 = vperm.slane %v379, 0
        %v381 = vmul.f32 %v378, %v380
        %v382 = vsel %vm131, %v381, 0.0
        %383 = vadd.xlane.f32.xlu0 %v382
        %v384 = vpop.xlane.xlu0 %383
        %vm385 = vcmp.gt.f32.partialorder %v384, 0.0
        %v386 = vsel %vm385, 1.0, -1.0
        %vm387 = vcmp.eq.s32.totalorder %v115, 25
        %v388 = vsel %vm387, %v386, %v378
        %v389 = vld [vmem:[%s5 + $0x1a] sm:$0x1]
        %v390 = vperm.slane %v389, 0
        %v391 = vmul.f32 %v388, %v390
        %v392 = vsel %vm131, %v391, 0.0
        %393 = vadd.xlane.f32.xlu0 %v392
        %v394 = vpop.xlane.xlu0 %393
        %vm395 = vcmp.gt.f32.partialorder %v394, 0.0
        %v396 = vsel %vm395, 1.0, -1.0
        %vm397 = vcmp.eq.s32.totalorder %v115, 26
        %v398 = vsel %vm397, %v396, %v388
        %v399 = vld [vmem:[%s5 + $0x1b] sm:$0x1]
        %v400 = vperm.slane %v399, 0
        %v401 = vmul.f32 %v398, %v400
        %v402 = vsel %vm131, %v401, 0.0
        %403 = vadd.xlane.f32.xlu0 %v402
        %v404 = vpop.xlane.xlu0 %403
        %vm405 = vcmp.gt.f32.partialorder %v404, 0.0
        %v406 = vsel %vm405, 1.0, -1.0
        %vm407 = vcmp.eq.s32.totalorder %v115, 27
        %v408 = vsel %vm407, %v406, %v398
        %v409 = vld [vmem:[%s5 + $0x1c] sm:$0x1]
        %v410 = vperm.slane %v409, 0
        %v411 = vmul.f32 %v408, %v410
        %v412 = vsel %vm131, %v411, 0.0
        %413 = vadd.xlane.f32.xlu0 %v412
        %v414 = vpop.xlane.xlu0 %413
        %vm415 = vcmp.gt.f32.partialorder %v414, 0.0
        %v416 = vsel %vm415, 1.0, -1.0
        %vm417 = vcmp.eq.s32.totalorder %v115, 28
        %v418 = vsel %vm417, %v416, %v408
        %v419 = vld [vmem:[%s5 + $0x1d] sm:$0x1]
        %v420 = vperm.slane %v419, 0
        %v421 = vmul.f32 %v418, %v420
        %v422 = vsel %vm131, %v421, 0.0
        %423 = vadd.xlane.f32.xlu0 %v422
        %v424 = vpop.xlane.xlu0 %423
        %vm425 = vcmp.gt.f32.partialorder %v424, 0.0
        %v426 = vsel %vm425, 1.0, -1.0
        %vm427 = vcmp.eq.s32.totalorder %v115, 29
        %v428 = vsel %vm427, %v426, %v418
        %v429 = vld [vmem:[%s5 + $0x1e] sm:$0x1]
        %v430 = vperm.slane %v429, 0
        %v431 = vmul.f32 %v428, %v430
        %v432 = vsel %vm131, %v431, 0.0
        %433 = vadd.xlane.f32.xlu0 %v432
        %v434 = vpop.xlane.xlu0 %433
        %vm435 = vcmp.gt.f32.partialorder %v434, 0.0
        %v436 = vsel %vm435, 1.0, -1.0
        %vm437 = vcmp.eq.s32.totalorder %v115, 30
        %v438 = vsel %vm437, %v436, %v428
        %v439 = vld [vmem:[%s5 + $0x1f] sm:$0x1]
        %v440 = vperm.slane %v439, 0
        %v441 = vmul.f32 %v438, %v440
        %v442 = vsel %vm131, %v441, 0.0
        %443 = vadd.xlane.f32.xlu0 %v442
        %v444 = vpop.xlane.xlu0 %443
        %vm445 = vcmp.gt.f32.partialorder %v444, 0.0
        %v446 = vsel %vm445, 1.0, -1.0
        %vm447 = vcmp.eq.s32.totalorder %v115, 31
        %v448 = vsel %vm447, %v446, %v438
        %v449 = vld [vmem:[%s5 + $0x20] sm:$0x1]
        %v450 = vperm.slane %v449, 0
        %v451 = vmul.f32 %v448, %v450
        %v452 = vsel %vm131, %v451, 0.0
        %453 = vadd.xlane.f32.xlu0 %v452
        %v454 = vpop.xlane.xlu0 %453
        %vm455 = vcmp.gt.f32.partialorder %v454, 0.0
        %v456 = vsel %vm455, 1.0, -1.0
        %vm457 = vcmp.eq.s32.totalorder %v115, 32
        %v458 = vsel %vm457, %v456, %v448
        %v459 = vld [vmem:[%s5 + $0x21] sm:$0x1]
        %v460 = vperm.slane %v459, 0
        %v461 = vmul.f32 %v458, %v460
        %v462 = vsel %vm131, %v461, 0.0
        %463 = vadd.xlane.f32.xlu0 %v462
        %v464 = vpop.xlane.xlu0 %463
        %vm465 = vcmp.gt.f32.partialorder %v464, 0.0
        %v466 = vsel %vm465, 1.0, -1.0
        %vm467 = vcmp.eq.s32.totalorder %v115, 33
        %v468 = vsel %vm467, %v466, %v458
        %v469 = vld [vmem:[%s5 + $0x22] sm:$0x1]
        %v470 = vperm.slane %v469, 0
        %v471 = vmul.f32 %v468, %v470
        %v472 = vsel %vm131, %v471, 0.0
        %473 = vadd.xlane.f32.xlu0 %v472
        %v474 = vpop.xlane.xlu0 %473
        %vm475 = vcmp.gt.f32.partialorder %v474, 0.0
        %v476 = vsel %vm475, 1.0, -1.0
        %vm477 = vcmp.eq.s32.totalorder %v115, 34
        %v478 = vsel %vm477, %v476, %v468
        %v479 = vld [vmem:[%s5 + $0x23] sm:$0x1]
        %v480 = vperm.slane %v479, 0
        %v481 = vmul.f32 %v478, %v480
        %v482 = vsel %vm131, %v481, 0.0
        %483 = vadd.xlane.f32.xlu0 %v482
        %v484 = vpop.xlane.xlu0 %483
        %vm485 = vcmp.gt.f32.partialorder %v484, 0.0
        %v486 = vsel %vm485, 1.0, -1.0
        %vm487 = vcmp.eq.s32.totalorder %v115, 35
        %v488 = vsel %vm487, %v486, %v478
        %v489 = vld [vmem:[%s5 + $0x24] sm:$0x1]
        %v490 = vperm.slane %v489, 0
        %v491 = vmul.f32 %v488, %v490
        %v492 = vsel %vm131, %v491, 0.0
        %493 = vadd.xlane.f32.xlu0 %v492
        %v494 = vpop.xlane.xlu0 %493
        %vm495 = vcmp.gt.f32.partialorder %v494, 0.0
        %v496 = vsel %vm495, 1.0, -1.0
        %vm497 = vcmp.eq.s32.totalorder %v115, 36
        %v498 = vsel %vm497, %v496, %v488
        %v499 = vld [vmem:[%s5 + $0x25] sm:$0x1]
        %v500 = vperm.slane %v499, 0
        %v501 = vmul.f32 %v498, %v500
        %v502 = vsel %vm131, %v501, 0.0
        %503 = vadd.xlane.f32.xlu0 %v502
        %v504 = vpop.xlane.xlu0 %503
        %vm505 = vcmp.gt.f32.partialorder %v504, 0.0
        %v506 = vsel %vm505, 1.0, -1.0
        %vm507 = vcmp.eq.s32.totalorder %v115, 37
        %v508 = vsel %vm507, %v506, %v498
        %v509 = vld [vmem:[%s5 + $0x26] sm:$0x1]
        %v510 = vperm.slane %v509, 0
        %v511 = vmul.f32 %v508, %v510
        %v512 = vsel %vm131, %v511, 0.0
        %513 = vadd.xlane.f32.xlu0 %v512
        %v514 = vpop.xlane.xlu0 %513
        %vm515 = vcmp.gt.f32.partialorder %v514, 0.0
        %v516 = vsel %vm515, 1.0, -1.0
        %vm517 = vcmp.eq.s32.totalorder %v115, 38
        %v518 = vsel %vm517, %v516, %v508
        %v519 = vld [vmem:[%s5 + $0x27] sm:$0x1]
        %v520 = vperm.slane %v519, 0
        %v521 = vmul.f32 %v518, %v520
        %v522 = vsel %vm131, %v521, 0.0
        %523 = vadd.xlane.f32.xlu0 %v522
        %v524 = vpop.xlane.xlu0 %523
        %vm525 = vcmp.gt.f32.partialorder %v524, 0.0
        %v526 = vsel %vm525, 1.0, -1.0
        %vm527 = vcmp.eq.s32.totalorder %v115, 39
        %v528 = vsel %vm527, %v526, %v518
        %v529 = vld [vmem:[%s5 + $0x28] sm:$0x1]
        %v530 = vperm.slane %v529, 0
        %v531 = vmul.f32 %v528, %v530
        %v532 = vsel %vm131, %v531, 0.0
        %533 = vadd.xlane.f32.xlu0 %v532
        %v534 = vpop.xlane.xlu0 %533
        %vm535 = vcmp.gt.f32.partialorder %v534, 0.0
        %v536 = vsel %vm535, 1.0, -1.0
        %vm537 = vcmp.eq.s32.totalorder %v115, 40
        %v538 = vsel %vm537, %v536, %v528
        %v539 = vld [vmem:[%s5 + $0x29] sm:$0x1]
        %v540 = vperm.slane %v539, 0
        %v541 = vmul.f32 %v538, %v540
        %v542 = vsel %vm131, %v541, 0.0
        %543 = vadd.xlane.f32.xlu0 %v542
        %v544 = vpop.xlane.xlu0 %543
        %vm545 = vcmp.gt.f32.partialorder %v544, 0.0
        %v546 = vsel %vm545, 1.0, -1.0
        %vm547 = vcmp.eq.s32.totalorder %v115, 41
        %v548 = vsel %vm547, %v546, %v538
        %v549 = vld [vmem:[%s5 + $0x2a] sm:$0x1]
        %v550 = vperm.slane %v549, 0
        %v551 = vmul.f32 %v548, %v550
        %v552 = vsel %vm131, %v551, 0.0
        %553 = vadd.xlane.f32.xlu0 %v552
        %v554 = vpop.xlane.xlu0 %553
        %vm555 = vcmp.gt.f32.partialorder %v554, 0.0
        %v556 = vsel %vm555, 1.0, -1.0
        %vm557 = vcmp.eq.s32.totalorder %v115, 42
        %v558 = vsel %vm557, %v556, %v548
        %v559 = vld [vmem:[%s5 + $0x2b] sm:$0x1]
        %v560 = vperm.slane %v559, 0
        %v561 = vmul.f32 %v558, %v560
        %v562 = vsel %vm131, %v561, 0.0
        %563 = vadd.xlane.f32.xlu0 %v562
        %v564 = vpop.xlane.xlu0 %563
        %vm565 = vcmp.gt.f32.partialorder %v564, 0.0
        %v566 = vsel %vm565, 1.0, -1.0
        %vm567 = vcmp.eq.s32.totalorder %v115, 43
        %v568 = vsel %vm567, %v566, %v558
        %v569 = vld [vmem:[%s5 + $0x2c] sm:$0x1]
        %v570 = vperm.slane %v569, 0
        %v571 = vmul.f32 %v568, %v570
        %v572 = vsel %vm131, %v571, 0.0
        %573 = vadd.xlane.f32.xlu0 %v572
        %v574 = vpop.xlane.xlu0 %573
        %vm575 = vcmp.gt.f32.partialorder %v574, 0.0
        %v576 = vsel %vm575, 1.0, -1.0
        %vm577 = vcmp.eq.s32.totalorder %v115, 44
        %v578 = vsel %vm577, %v576, %v568
        %v579 = vld [vmem:[%s5 + $0x2d] sm:$0x1]
        %v580 = vperm.slane %v579, 0
        %v581 = vmul.f32 %v578, %v580
        %v582 = vsel %vm131, %v581, 0.0
        %583 = vadd.xlane.f32.xlu0 %v582
        %v584 = vpop.xlane.xlu0 %583
        %vm585 = vcmp.gt.f32.partialorder %v584, 0.0
        %v586 = vsel %vm585, 1.0, -1.0
        %vm587 = vcmp.eq.s32.totalorder %v115, 45
        %v588 = vsel %vm587, %v586, %v578
        %v589 = vld [vmem:[%s5 + $0x2e] sm:$0x1]
        %v590 = vperm.slane %v589, 0
        %v591 = vmul.f32 %v588, %v590
        %v592 = vsel %vm131, %v591, 0.0
        %593 = vadd.xlane.f32.xlu0 %v592
        %v594 = vpop.xlane.xlu0 %593
        %vm595 = vcmp.gt.f32.partialorder %v594, 0.0
        %v596 = vsel %vm595, 1.0, -1.0
        %vm597 = vcmp.eq.s32.totalorder %v115, 46
        %v598 = vsel %vm597, %v596, %v588
        %v599 = vld [vmem:[%s5 + $0x2f] sm:$0x1]
        %v600 = vperm.slane %v599, 0
        %v601 = vmul.f32 %v598, %v600
        %v602 = vsel %vm131, %v601, 0.0
        %603 = vadd.xlane.f32.xlu0 %v602
        %v604 = vpop.xlane.xlu0 %603
        %vm605 = vcmp.gt.f32.partialorder %v604, 0.0
        %v606 = vsel %vm605, 1.0, -1.0
        %vm607 = vcmp.eq.s32.totalorder %v115, 47
        %v608 = vsel %vm607, %v606, %v598
        %v609 = vld [vmem:[%s5 + $0x30] sm:$0x1]
        %v610 = vperm.slane %v609, 0
        %v611 = vmul.f32 %v608, %v610
        %v612 = vsel %vm131, %v611, 0.0
        %613 = vadd.xlane.f32.xlu0 %v612
        %v614 = vpop.xlane.xlu0 %613
        %vm615 = vcmp.gt.f32.partialorder %v614, 0.0
        %v616 = vsel %vm615, 1.0, -1.0
        %vm617 = vcmp.eq.s32.totalorder %v115, 48
        %v618 = vsel %vm617, %v616, %v608
        %v619 = vld [vmem:[%s5 + $0x31] sm:$0x1]
        %v620 = vperm.slane %v619, 0
        %v621 = vmul.f32 %v618, %v620
        %v622 = vsel %vm131, %v621, 0.0
        %623 = vadd.xlane.f32.xlu0 %v622
        %v624 = vpop.xlane.xlu0 %623
        %vm625 = vcmp.gt.f32.partialorder %v624, 0.0
        %v626 = vsel %vm625, 1.0, -1.0
        %vm627 = vcmp.eq.s32.totalorder %v115, 49
        %v628 = vsel %vm627, %v626, %v618
        %v629 = vld [vmem:[%s5 + $0x32] sm:$0x1]
        %v630 = vperm.slane %v629, 0
        %v631 = vmul.f32 %v628, %v630
        %v632 = vsel %vm131, %v631, 0.0
        %633 = vadd.xlane.f32.xlu0 %v632
        %v634 = vpop.xlane.xlu0 %633
        %vm635 = vcmp.gt.f32.partialorder %v634, 0.0
        %v636 = vsel %vm635, 1.0, -1.0
        %vm637 = vcmp.eq.s32.totalorder %v115, 50
        %v638 = vsel %vm637, %v636, %v628
        %v639 = vld [vmem:[%s5 + $0x33] sm:$0x1]
        %v640 = vperm.slane %v639, 0
        %v641 = vmul.f32 %v638, %v640
        %v642 = vsel %vm131, %v641, 0.0
        %643 = vadd.xlane.f32.xlu0 %v642
        %v644 = vpop.xlane.xlu0 %643
        %vm645 = vcmp.gt.f32.partialorder %v644, 0.0
        %v646 = vsel %vm645, 1.0, -1.0
        %vm647 = vcmp.eq.s32.totalorder %v115, 51
        %v648 = vsel %vm647, %v646, %v638
        %v649 = vld [vmem:[%s5 + $0x34] sm:$0x1]
        %v650 = vperm.slane %v649, 0
        %v651 = vmul.f32 %v648, %v650
        %v652 = vsel %vm131, %v651, 0.0
        %653 = vadd.xlane.f32.xlu0 %v652
        %v654 = vpop.xlane.xlu0 %653
        %vm655 = vcmp.gt.f32.partialorder %v654, 0.0
        %v656 = vsel %vm655, 1.0, -1.0
        %vm657 = vcmp.eq.s32.totalorder %v115, 52
        %v658 = vsel %vm657, %v656, %v648
        %v659 = vld [vmem:[%s5 + $0x35] sm:$0x1]
        %v660 = vperm.slane %v659, 0
        %v661 = vmul.f32 %v658, %v660
        %v662 = vsel %vm131, %v661, 0.0
        %663 = vadd.xlane.f32.xlu0 %v662
        %v664 = vpop.xlane.xlu0 %663
        %vm665 = vcmp.gt.f32.partialorder %v664, 0.0
        %v666 = vsel %vm665, 1.0, -1.0
        %vm667 = vcmp.eq.s32.totalorder %v115, 53
        %v668 = vsel %vm667, %v666, %v658
        %v669 = vld [vmem:[%s5 + $0x36] sm:$0x1]
        %v670 = vperm.slane %v669, 0
        %v671 = vmul.f32 %v668, %v670
        %v672 = vsel %vm131, %v671, 0.0
        %673 = vadd.xlane.f32.xlu0 %v672
        %v674 = vpop.xlane.xlu0 %673
        %vm675 = vcmp.gt.f32.partialorder %v674, 0.0
        %v676 = vsel %vm675, 1.0, -1.0
        %vm677 = vcmp.eq.s32.totalorder %v115, 54
        %v678 = vsel %vm677, %v676, %v668
        %v679 = vld [vmem:[%s5 + $0x37] sm:$0x1]
        %v680 = vperm.slane %v679, 0
        %v681 = vmul.f32 %v678, %v680
        %v682 = vsel %vm131, %v681, 0.0
        %683 = vadd.xlane.f32.xlu0 %v682
        %v684 = vpop.xlane.xlu0 %683
        %vm685 = vcmp.gt.f32.partialorder %v684, 0.0
        %v686 = vsel %vm685, 1.0, -1.0
        %vm687 = vcmp.eq.s32.totalorder %v115, 55
        %v688 = vsel %vm687, %v686, %v678
        %v689 = vld [vmem:[%s5 + $0x38] sm:$0x1]
        %v690 = vperm.slane %v689, 0
        %v691 = vmul.f32 %v688, %v690
        %v692 = vsel %vm131, %v691, 0.0
        %693 = vadd.xlane.f32.xlu0 %v692
        %v694 = vpop.xlane.xlu0 %693
        %vm695 = vcmp.gt.f32.partialorder %v694, 0.0
        %v696 = vsel %vm695, 1.0, -1.0
        %vm697 = vcmp.eq.s32.totalorder %v115, 56
        %v698 = vsel %vm697, %v696, %v688
        %v699 = vld [vmem:[%s5 + $0x39] sm:$0x1]
        %v700 = vperm.slane %v699, 0
        %v701 = vmul.f32 %v698, %v700
        %v702 = vsel %vm131, %v701, 0.0
        %703 = vadd.xlane.f32.xlu0 %v702
        %v704 = vpop.xlane.xlu0 %703
        %vm705 = vcmp.gt.f32.partialorder %v704, 0.0
        %v706 = vsel %vm705, 1.0, -1.0
        %vm707 = vcmp.eq.s32.totalorder %v115, 57
        %v708 = vsel %vm707, %v706, %v698
        %v709 = vld [vmem:[%s5 + $0x3a] sm:$0x1]
        %v710 = vperm.slane %v709, 0
        %v711 = vmul.f32 %v708, %v710
        %v712 = vsel %vm131, %v711, 0.0
        %713 = vadd.xlane.f32.xlu0 %v712
        %v714 = vpop.xlane.xlu0 %713
        %vm715 = vcmp.gt.f32.partialorder %v714, 0.0
        %v716 = vsel %vm715, 1.0, -1.0
        %vm717 = vcmp.eq.s32.totalorder %v115, 58
        %v718 = vsel %vm717, %v716, %v708
        %v719 = vld [vmem:[%s5 + $0x3b] sm:$0x1]
        %v720 = vperm.slane %v719, 0
        %v721 = vmul.f32 %v718, %v720
        %v722 = vsel %vm131, %v721, 0.0
        %723 = vadd.xlane.f32.xlu0 %v722
        %v724 = vpop.xlane.xlu0 %723
        %vm725 = vcmp.gt.f32.partialorder %v724, 0.0
        %v726 = vsel %vm725, 1.0, -1.0
        %vm727 = vcmp.eq.s32.totalorder %v115, 59
        %v728 = vsel %vm727, %v726, %v718
        %v729 = vld [vmem:[%s5 + $0x3c] sm:$0x1]
        %v730 = vperm.slane %v729, 0
        %v731 = vmul.f32 %v728, %v730
        %v732 = vsel %vm131, %v731, 0.0
        %733 = vadd.xlane.f32.xlu0 %v732
        %v734 = vpop.xlane.xlu0 %733
        %vm735 = vcmp.gt.f32.partialorder %v734, 0.0
        %v736 = vsel %vm735, 1.0, -1.0
        %vm737 = vcmp.eq.s32.totalorder %v115, 60
        %v738 = vsel %vm737, %v736, %v728
        %v739 = vld [vmem:[%s5 + $0x3d] sm:$0x1]
        %v740 = vperm.slane %v739, 0
        %v741 = vmul.f32 %v738, %v740
        %v742 = vsel %vm131, %v741, 0.0
        %743 = vadd.xlane.f32.xlu0 %v742
        %v744 = vpop.xlane.xlu0 %743
        %vm745 = vcmp.gt.f32.partialorder %v744, 0.0
        %v746 = vsel %vm745, 1.0, -1.0
        %vm747 = vcmp.eq.s32.totalorder %v115, 61
        %v748 = vsel %vm747, %v746, %v738
        %v749 = vld [vmem:[%s5 + $0x3e] sm:$0x1]
        %v750 = vperm.slane %v749, 0
        %v751 = vmul.f32 %v748, %v750
        %v752 = vsel %vm131, %v751, 0.0
        %753 = vadd.xlane.f32.xlu0 %v752
        %v754 = vpop.xlane.xlu0 %753
        %vm755 = vcmp.gt.f32.partialorder %v754, 0.0
        %v756 = vsel %vm755, 1.0, -1.0
        %vm757 = vcmp.eq.s32.totalorder %v115, 62
        %v758 = vsel %vm757, %v756, %v748
        %v759 = vld [vmem:[%s5 + $0x3f] sm:$0x1]
        %v760 = vperm.slane %v759, 0
        %v761 = vmul.f32 %v758, %v760
        %v762 = vsel %vm131, %v761, 0.0
        %763 = vadd.xlane.f32.xlu0 %v762
        %v764 = vpop.xlane.xlu0 %763
        %vm765 = vcmp.gt.f32.partialorder %v764, 0.0
        %v766 = vsel %vm765, 1.0, -1.0
        %vm767 = vcmp.eq.s32.totalorder %v115, 63
        %v768 = vsel %vm767, %v766, %v758
        %769 = vst [vmem:[#allocation2] sm:$0x3] %v768
        %v770 = vsub.f32 %v768, %v127
        %v771 = vand.u32 2147483647, %v770
        %v772 = vsel %vm131, %v771, 0.0
        %773 = vadd.xlane.f32.xlu0 %v772
        %v774 = vpop.xlane.xlu0 %773
        %v775 = vrot.slane %v774, 4
        %v776 = vadd.f32 %v774, %v775
        %v777 = vrot.slane %v776, 2
        %v778 = vadd.f32 %v776, %v777
        %v779 = vrot.slane %v778, 1
        %v780 = vadd.f32 %v778, %v779
        %s781 = vtos %v780
        %p782 = scmp.gt.f32.partialorder %s781, 0.0
        %s783 = scalar_select %p782, 1, 0
        %784 = sst [smem:[%s112]] %s783
      $region64: #{tpu_custom_call.1} parent=57 // pred_fallthru
        _
    $region58: #{tpu_custom_call.1} parent=1 // loop_footer
      %s121 = sadd.s32 1, %s117
    $region59: #{tpu_custom_call.1} parent=1 // loop_footer_branch
      %116 = sbr.rel target = $region55
    $region60: #{tpu_custom_call.1} parent=1 // loop_exit
      _
    %v785 = vld [vmem:[#allocation2] sm:$0x3]
    %vm786 = vcmp.gt.f32.partialorder %v785, 0.0
    %v787 = vsel %vm786, 1.0, 0.0
    %v788 = vld [vmem:[%s6] sm:$0xff]
    %v789 = vld [vmem:[%s6 + $0x8] sm:$0xff]
    %v790 = vld [vmem:[%s7] sm:$0xff]
    %v791 = vld [vmem:[%s7 + $0x8] sm:$0xff]
    %v792 = vld [vmem:[%s7 + $0x10] sm:$0xff]
    %v793 = vld [vmem:[%s7 + $0x18] sm:$0xff]
    %v794 = vld [vmem:[%s7 + $0x20] sm:$0xff]
    %v795 = vld [vmem:[%s7 + $0x28] sm:$0xff]
    %v796 = vld [vmem:[%s7 + $0x30] sm:$0xff]
    %v797 = vld [vmem:[%s7 + $0x38] sm:$0xff]
    %v798 = vld [vmem:[%s7 + $0x40] sm:$0xff]
    %v799 = vld [vmem:[%s7 + $0x48] sm:$0xff]
    %v800 = vld [vmem:[%s7 + $0x50] sm:$0xff]
    %v801 = vld [vmem:[%s7 + $0x58] sm:$0xff]
    %v802 = vld [vmem:[%s7 + $0x60] sm:$0xff]
    %v803 = vld [vmem:[%s7 + $0x68] sm:$0xff]
    %v804 = vld [vmem:[%s7 + $0x70] sm:$0xff]
    %v805 = vld [vmem:[%s7 + $0x78] sm:$0xff]
    %806 = vmatpush.msra.mxu0 %v805
    %807 = vmatpush.msra.mxu0 %v804
    %808 = vmatpush.msra.mxu0 %v803
    %809 = vmatpush.msra.mxu0 %v802
    %810 = vmatpush.msra.mxu0 %v801
    %811 = vmatpush.msra.mxu0 %v800
    %812 = vmatpush.msra.mxu0 %v799
    %813 = vmatpush.msra.mxu0 %v798
    %814 = vmatpush.msra.mxu0 %v797
    %815 = vmatpush.msra.mxu0 %v796
    %816 = vmatpush.msra.mxu0 %v795
    %817 = vmatpush.msra.mxu0 %v794
    %818 = vmatpush.msra.mxu0 %v793
    %819 = vmatpush.msra.mxu0 %v792
    %820 = vmatpush.msra.mxu0 %v791
    %821 = vmatpush.msra.mxu0 %v790
    %822 = vmatmul.f32.gmra.mxu0 %v787
    %v823 = vpop.f32.mrf.mxu0
    %v824 = vadd.f32 0.0, %v823
    %825 = vdwg.mxu0
    %826 = vmatpush.msra.mxu0 0.0
    %827 = vmatpush.msra.mxu0 0.0
    %828 = vmatpush.msra.mxu0 0.0
    %829 = vmatpush.msra.mxu0 0.0
    %830 = vmatpush.msra.mxu0 0.0
    %831 = vmatpush.msra.mxu0 0.0
    %832 = vmatpush.msra.mxu0 0.0
    %833 = vmatpush.msra.mxu0 0.0
    %834 = vmatpush.msra.mxu0 0.0
    %835 = vmatpush.msra.mxu0 0.0
    %836 = vmatpush.msra.mxu0 0.0
    %837 = vmatpush.msra.mxu0 0.0
    %838 = vmatpush.msra.mxu0 0.0
    %839 = vmatpush.msra.mxu0 0.0
    %840 = vmatpush.msra.mxu0 %v789
    %841 = vmatpush.msra.mxu0 %v788
    %842 = vmatmul.f32.gmra.mxu0 %v54
    %v843 = vpop.f32.mrf.mxu0
    %v844 = vadd.f32 %v824, %v843
    %845 = vdwg.mxu0
    %v846 = vld [vmem:[%s8] sm:$0x1]
    %v848 = vperm.slane %v846, 0
    %v850 = vadd.f32 %v844, %v848
    %v851 = vmax.f32 %v850, 0.0
    %v852 = vld [vmem:[%s9] sm:$0xff]
    %v853 = vld [vmem:[%s9 + $0x8] sm:$0xff]
    %v854 = vld [vmem:[%s9 + $0x10] sm:$0xff]
    %v855 = vld [vmem:[%s9 + $0x18] sm:$0xff]
    %v856 = vld [vmem:[%s10] sm:$0x1]
    %v858 = vperm.slane %v856, 0
    %v861 = vsel %vm85, %v851, 0
    %863 = vmatpush.msra.mxu0 0.0
    %864 = vmatpush.msra.mxu0 0.0
    %865 = vmatpush.msra.mxu0 0.0
    %866 = vmatpush.msra.mxu0 0.0
    %867 = vmatpush.msra.mxu0 0.0
    %868 = vmatpush.msra.mxu0 0.0
    %869 = vmatpush.msra.mxu0 0.0
    %870 = vmatpush.msra.mxu0 0.0
    %871 = vmatpush.msra.mxu0 0.0
    %872 = vmatpush.msra.mxu0 0.0
    %873 = vmatpush.msra.mxu0 0.0
    %874 = vmatpush.msra.mxu0 0.0
    %875 = vmatpush.msra.mxu0 %v855
    %876 = vmatpush.msra.mxu0 %v854
    %877 = vmatpush.msra.mxu0 %v853
    %878 = vmatpush.msra.mxu0 %v852
    %879 = vmatmul.f32.gmra.mxu0 %v861
    %v880 = vpop.f32.mrf.mxu0
    %v881 = vadd.f32 %v858, %v880
    %882 = vdwg.mxu0
    %v883 = vmax.f32 %v881, 0.0
    %v884 = vld [vmem:[%s11] sm:$0xff]
    %v885 = vld [vmem:[%s11 + $0x8] sm:$0xff]
    %v886 = vld [vmem:[%s11 + $0x10] sm:$0xff]
    %v887 = vld [vmem:[%s11 + $0x18] sm:$0xff]
    %v888 = vld [vmem:[%s12] sm:$0x1]
    %v890 = vperm.slane %v888, 0
    %v893 = vsel %vm85, %v883, 0
    %895 = vmatpush.msra.mxu0 0.0
    %896 = vmatpush.msra.mxu0 0.0
    %897 = vmatpush.msra.mxu0 0.0
    %898 = vmatpush.msra.mxu0 0.0
    %899 = vmatpush.msra.mxu0 0.0
    %900 = vmatpush.msra.mxu0 0.0
    %901 = vmatpush.msra.mxu0 0.0
    %902 = vmatpush.msra.mxu0 0.0
    %903 = vmatpush.msra.mxu0 0.0
    %904 = vmatpush.msra.mxu0 0.0
    %905 = vmatpush.msra.mxu0 0.0
    %906 = vmatpush.msra.mxu0 0.0
    %907 = vmatpush.msra.mxu0 %v887
    %908 = vmatpush.msra.mxu0 %v886
    %909 = vmatpush.msra.mxu0 %v885
    %910 = vmatpush.msra.mxu0 %v884
    %911 = vmatmul.f32.gmra.mxu0 %v893
    %v912 = vpop.f32.mrf.mxu0
    %v913 = vadd.f32 %v890, %v912
    %914 = vdwg.mxu0
    %vm915 = vcmask 9216
    %916 = vst.msk [vmem:[#allocation4] sm:$0x3] %vm915, %v913
    // Predicated region
    $region65: #{tpu_custom_call.1} parent=1 // pred_check
      _
    $region66: #{tpu_custom_call.1} parent=1 // pred_check_branch
      %918 = sbr.rel (0) target = $region68
    $region67: #{tpu_custom_call.1} parent=1 // pred_region
      %920 = vsyncadd [#allocation5], 0
      %s922 = sshll.u32 [#allocation4], 4
      %s923 = int_to_ptr.vmem [resolvable:$true] %s922
      %s924 = sshll.u32 %s13, 4
      %s925 = int_to_ptr.hbm [resolvable:$true] %s924
      %927 = dma.vmem_to_hbm [thread:$0]  %s923, 32, %s925, [#allocation5]
    $region68: #{tpu_custom_call.1} parent=1 // pred_fallthru
      _
    // Predicated region
    $region69: #{tpu_custom_call.1} parent=1 // pred_check
      _
    $region70: #{tpu_custom_call.1} parent=1 // pred_check_branch
      %929 = sbr.rel (0) target = $region72
    $region71: #{tpu_custom_call.1} parent=1 // pred_region
      %931 = dma.done [#allocation5], 32
    $region72: #{tpu_custom_call.1} parent=1 // pred_fallthru
      _
    %932 = vsyncpa [#allocation5], 1

</llo_original>
